<compile_context>
chip_gen: v6e
topology: v6e:2x2x1
jax: 0.10.0
libtpu: 0.0.40
codegen_flags: <defaults>
</compile_context>

<pallas_src>
import jax
import jax.numpy as jnp
from jax.experimental import pallas as pl
from jax.experimental.pallas import tpu as pltpu

K_IN = 28 * 28          # 784 true input features
K1_PAD = 896            # 784 padded up to 7*128 (MXU lane multiple)
H = 512
N_OUT = 10
N_OUT_PAD = 128         # lane-dense, unmasked output stores


def _round_up(a, m):
    return ((a + m - 1) // m) * m


def mlp_kernel(x_ref, w1_ref, b1_ref, w2_ref, b2_ref, w3_ref, b3_ref, o_ref,
               xpad_ref):
    # x_ref: (TILE_B, 784) f32 ; xpad_ref: (TILE_B, 896) bf16 VMEM scratch ;
    # w1: (896, 512) bf16 ; w2: (512, 512) bf16 ; w3: (512, 128) bf16 ;
    # biases f32 (1, out) so the adds stay in f32.
    #
    # In-kernel cast + zero-pad: single HBM pass over x, aligned K for layer 1.
    xpad_ref[...] = jnp.zeros_like(xpad_ref)
    xpad_ref[:, :K_IN] = x_ref[...].astype(jnp.bfloat16)

    h1 = jnp.dot(xpad_ref[...], w1_ref[...],
                 preferred_element_type=jnp.float32) + b1_ref[...]
    h1 = jnp.maximum(h1, 0.0).astype(jnp.bfloat16)
    h2 = jnp.dot(h1, w2_ref[...],
                 preferred_element_type=jnp.float32) + b2_ref[...]
    h2 = jnp.maximum(h2, 0.0).astype(jnp.bfloat16)
    logits = jnp.dot(h2, w3_ref[...],
                     preferred_element_type=jnp.float32) + b3_ref[...]
    o_ref[...] = logits.astype(o_ref.dtype)


def neural_network_forward(x_nchw, params):
    """x_nchw: (B, 1, 28, 28) float32. Returns logits (B, 10) float32."""
    w1, b1, w2, b2, w3, b3 = params
    B = x_nchw.shape[0]

    # nn.Flatten(): flatten everything except batch (row-major).  No pad/cast
    # here -- that happens inside the kernel (saves one HBM pass over x).
    x_flat = x_nchw.reshape(B, -1).astype(jnp.float32)

    # Batch tiling:
    #  * small batch: one step, rounded up to 16 rows (bf16 sublane granule)
    #  * large batch: tiles up to 1024 rows to amortize per-step overhead, but
    #    always >= 2 steps so both v7x TensorCores are used.
    B16 = _round_up(B, 16)
    if B16 < 512:
        TILE_B = B16
    else:
        TILE_B = min(1024, _round_up((B16 + 1) // 2, 16))
    n_tiles = pl.cdiv(B16, TILE_B)
    B_pad = n_tiles * TILE_B
    if B_pad != B:
        x_flat = jnp.pad(x_flat, ((0, B_pad - B), (0, 0)))

    const_spec = lambda shape: pl.BlockSpec(shape, lambda i: tuple(0 for _ in shape))

    weight_bytes = sum(int(a.size) * a.dtype.itemsize
                       for a in (w1, b1, w2, b2, w3, b3))
    bytes_accessed = (B_pad * K_IN * 4            # x, single f32 pass
                      + weight_bytes
                      + B_pad * N_OUT_PAD * 4)    # logits writeback
    flops = 2 * B_pad * (K1_PAD * H + H * H + H * N_OUT_PAD)

    out = pl.pallas_call(
        mlp_kernel,
        out_shape=jax.ShapeDtypeStruct((B_pad, N_OUT_PAD), jnp.float32),
        grid=(n_tiles,),
        in_specs=[
            # x: tiled over batch; last dim 784 == full array dim (legal).
            pl.BlockSpec((TILE_B, K_IN), lambda i: (i, 0)),
            const_spec(w1.shape), const_spec(b1.shape),   # weights: VMEM-resident
            const_spec(w2.shape), const_spec(b2.shape),
            const_spec(w3.shape), const_spec(b3.shape),
        ],
        out_specs=pl.BlockSpec((TILE_B, N_OUT_PAD), lambda i: (i, 0)),
        scratch_shapes=[pltpu.VMEM((TILE_B, K1_PAD), jnp.bfloat16)],
        compiler_params=pltpu.CompilerParams(
            dimension_semantics=("parallel",),
            vmem_limit_bytes=48 << 20,
        ),
        cost_estimate=pl.CostEstimate(
            flops=flops, transcendentals=0, bytes_accessed=bytes_accessed),
    )(x_flat, w1, b1, w2, b2, w3, b3)

    return out[:B, :N_OUT]


def init_params(key):
    """Deterministic init mimicking torch nn.Linear defaults
    (uniform(-1/sqrt(fan_in), 1/sqrt(fan_in))). Weights stored as (in, out),
    zero-padded to MXU-friendly shapes and cast to bf16; biases stay f32."""
    def linear(k, fan_in, fan_out, pad_in, pad_out):
        kw, kb = jax.random.split(k)
        bound = 1.0 / jnp.sqrt(fan_in)
        w = jax.random.uniform(kw, (fan_in, fan_out), jnp.float32, -bound, bound)
        b = jax.random.uniform(kb, (1, fan_out), jnp.float32, -bound, bound)
        w = jnp.pad(w, ((0, pad_in - fan_in), (0, pad_out - fan_out)))
        b = jnp.pad(b, ((0, 0), (0, pad_out - fan_out)))
        return w.astype(jnp.bfloat16), b

    k1, k2, k3 = jax.random.split(key, 3)
    w1, b1 = linear(k1, K_IN, H, K1_PAD, H)
    w2, b2 = linear(k2, H, H, H, H)
    w3, b3 = linear(k3, H, N_OUT, H, N_OUT_PAD)
    return (w1, b1, w2, b2, w3, b3)


if __name__ == "__main__":
    key = jax.random.PRNGKey(0)
    k_params, k_x = jax.random.split(key)
    params = init_params(k_params)

    B = 4
    x = jax.random.normal(k_x, (B, 1, 28, 28), jnp.float32)

    logits = neural_network_forward(x, params)
    logits = jax.block_until_ready(logits)

    # Pure-JAX reference of the same (bf16 weights, f32 accumulate) math.
    w1, b1, w2, b2, w3, b3 = params
    xf = x.reshape(B, -1).astype(jnp.bfloat16)
    ref = jnp.maximum(
        jnp.dot(xf, w1[:K_IN], preferred_element_type=jnp.float32) + b1, 0.0)
    ref = ref.astype(jnp.bfloat16)
    ref = jnp.maximum(
        jnp.dot(ref, w2, preferred_element_type=jnp.float32) + b2, 0.0)
    ref = ref.astype(jnp.bfloat16)
    ref = (jnp.dot(ref, w3, preferred_element_type=jnp.float32) + b3)[:, :N_OUT]

    assert logits.shape == (B, N_OUT)
    assert jnp.allclose(logits, ref, atol=1e-2, rtol=1e-2)

    print("KERNEL_OK")
</pallas_src>

<mosaic_0001>
module attributes {stable_mosaic.version = 11 : i64} {
  func.func @mlp_kernel(%arg0: i32, %arg1: memref<16x784xf32, #tpu.memory_space<vmem>>, %arg2: memref<896x512xbf16, #tpu.memory_space<vmem>>, %arg3: memref<1x512xf32, #tpu.memory_space<vmem>>, %arg4: memref<512x512xbf16, #tpu.memory_space<vmem>>, %arg5: memref<1x512xf32, #tpu.memory_space<vmem>>, %arg6: memref<512x128xbf16, #tpu.memory_space<vmem>>, %arg7: memref<1x128xf32, #tpu.memory_space<vmem>>, %arg8: memref<16x128xf32, #tpu.memory_space<vmem>>, %arg9: memref<16x896xbf16, #tpu.memory_space<vmem>>) attributes {dimension_semantics = [#tpu.dimension_semantics<parallel>], iteration_bounds = array<i64: 1>, scalar_prefetch = 0 : i64, scratch_operands = 1 : i64, tpu.core_type = #tpu.core_type<tc>, window_params = [{transform_indices = @transform_0, window_bounds = array<i64: 16, 784>}, {pipeline_mode = #tpu.pipeline_mode<synchronous>, transform_indices = @transform_1, window_bounds = array<i64: 896, 512>}, {pipeline_mode = #tpu.pipeline_mode<synchronous>, transform_indices = @transform_2, window_bounds = array<i64: 1, 512>}, {pipeline_mode = #tpu.pipeline_mode<synchronous>, transform_indices = @transform_3, window_bounds = array<i64: 512, 512>}, {pipeline_mode = #tpu.pipeline_mode<synchronous>, transform_indices = @transform_4, window_bounds = array<i64: 1, 512>}, {pipeline_mode = #tpu.pipeline_mode<synchronous>, transform_indices = @transform_5, window_bounds = array<i64: 512, 128>}, {pipeline_mode = #tpu.pipeline_mode<synchronous>, transform_indices = @transform_6, window_bounds = array<i64: 1, 128>}, {transform_indices = @transform_7, window_bounds = array<i64: 16, 128>}]} {
    %cst = arith.constant 0.000000e+00 : bf16
    %0 = vector.broadcast %cst : bf16 to vector<16x896xbf16>
    %c0 = arith.constant 0 : index
    %c0_0 = arith.constant 0 : index
    %1 = vector.load %arg9[%c0, %c0_0] : memref<16x896xbf16, #tpu.memory_space<vmem>>, vector<16x896xbf16>
    tpu.vector_store %arg9[%c0, %c0_0], %0 {strides = array<i32>} : memref<16x896xbf16, #tpu.memory_space<vmem>>, vector<16x896xbf16>,
    %c0_1 = arith.constant 0 : index
    %c0_2 = arith.constant 0 : index
    %2 = vector.load %arg1[%c0_1, %c0_2] : memref<16x784xf32, #tpu.memory_space<vmem>>, vector<16x784xf32>
    %3 = arith.truncf %2 : vector<16x784xf32> to vector<16x784xbf16>
    %c0_3 = arith.constant 0 : index
    %c0_4 = arith.constant 0 : index
    %4 = vector.load %arg9[%c0_3, %c0_4] : memref<16x896xbf16, #tpu.memory_space<vmem>>, vector<16x784xbf16>
    tpu.vector_store %arg9[%c0_3, %c0_4], %3 {strides = array<i32>} : memref<16x896xbf16, #tpu.memory_space<vmem>>, vector<16x784xbf16>,
    %c0_5 = arith.constant 0 : index
    %c0_6 = arith.constant 0 : index
    %5 = vector.load %arg9[%c0_5, %c0_6] : memref<16x896xbf16, #tpu.memory_space<vmem>>, vector<16x896xbf16>
    %c0_7 = arith.constant 0 : index
    %c0_8 = arith.constant 0 : index
    %6 = vector.load %arg2[%c0_7, %c0_8] : memref<896x512xbf16, #tpu.memory_space<vmem>>, vector<896x512xbf16>
    %cst_9 = arith.constant dense<0.000000e+00> : vector<16x512xf32>
    %7 = tpu.matmul %5, %6, %cst_9 {dimension_numbers = #tpu.dot_dimension_numbers<[1], [0], [0], [1], [0, 0, 1, 1], [], []>} : vector<16x896xbf16>, vector<896x512xbf16>, vector<16x512xf32> -> vector<16x512xf32>
    %c0_10 = arith.constant 0 : index
    %c0_11 = arith.constant 0 : index
    %8 = vector.load %arg3[%c0_10, %c0_11] : memref<1x512xf32, #tpu.memory_space<vmem>>, vector<1x512xf32>
    %9 = vector.broadcast %8 : vector<1x512xf32> to vector<16x512xf32>
    %10 = arith.addf %7, %9 : vector<16x512xf32>
    %cst_12 = arith.constant 0.000000e+00 : f32
    %11 = vector.broadcast %cst_12 : f32 to vector<16x512xf32>
    %12 = arith.maximumf %10, %11 : vector<16x512xf32>
    %13 = arith.truncf %12 : vector<16x512xf32> to vector<16x512xbf16>
    %c0_13 = arith.constant 0 : index
    %c0_14 = arith.constant 0 : index
    %14 = vector.load %arg4[%c0_13, %c0_14] : memref<512x512xbf16, #tpu.memory_space<vmem>>, vector<512x512xbf16>
    %cst_15 = arith.constant dense<0.000000e+00> : vector<16x512xf32>
    %15 = tpu.matmul %13, %14, %cst_15 {dimension_numbers = #tpu.dot_dimension_numbers<[1], [0], [0], [1], [0, 0, 1, 1], [], []>} : vector<16x512xbf16>, vector<512x512xbf16>, vector<16x512xf32> -> vector<16x512xf32>
    %c0_16 = arith.constant 0 : index
    %c0_17 = arith.constant 0 : index
    %16 = vector.load %arg5[%c0_16, %c0_17] : memref<1x512xf32, #tpu.memory_space<vmem>>, vector<1x512xf32>
    %17 = vector.broadcast %16 : vector<1x512xf32> to vector<16x512xf32>
    %18 = arith.addf %15, %17 : vector<16x512xf32>
    %cst_18 = arith.constant 0.000000e+00 : f32
    %19 = vector.broadcast %cst_18 : f32 to vector<16x512xf32>
    %20 = arith.maximumf %18, %19 : vector<16x512xf32>
    %21 = arith.truncf %20 : vector<16x512xf32> to vector<16x512xbf16>
    %c0_19 = arith.constant 0 : index
    %c0_20 = arith.constant 0 : index
    %22 = vector.load %arg6[%c0_19, %c0_20] : memref<512x128xbf16, #tpu.memory_space<vmem>>, vector<512x128xbf16>
    %cst_21 = arith.constant dense<0.000000e+00> : vector<16x128xf32>
    %23 = tpu.matmul %21, %22, %cst_21 {dimension_numbers = #tpu.dot_dimension_numbers<[1], [0], [0], [1], [0, 0, 1, 1], [], []>} : vector<16x512xbf16>, vector<512x128xbf16>, vector<16x128xf32> -> vector<16x128xf32>
    %c0_22 = arith.constant 0 : index
    %c0_23 = arith.constant 0 : index
    %24 = vector.load %arg7[%c0_22, %c0_23] : memref<1x128xf32, #tpu.memory_space<vmem>>, vector<1x128xf32>
    %25 = vector.broadcast %24 : vector<1x128xf32> to vector<16x128xf32>
    %26 = arith.addf %23, %25 : vector<16x128xf32>
    %c0_24 = arith.constant 0 : index
    %c0_25 = arith.constant 0 : index
    %27 = vector.load %arg8[%c0_24, %c0_25] : memref<16x128xf32, #tpu.memory_space<vmem>>, vector<16x128xf32>
    tpu.vector_store %arg8[%c0_24, %c0_25], %26 {strides = array<i32>} : memref<16x128xf32, #tpu.memory_space<vmem>>, vector<16x128xf32>,
    return
  }
  func.func @transform_0(%arg0: i32) -> (i32, i32) {
    %c0_i32 = arith.constant 0 : i32
    %c0_i32_0 = arith.constant 0 : i32
    return %arg0, %c0_i32 : i32, i32
  }
  func.func @transform_1(%arg0: i32) -> (i32, i32) {
    %c0_i32 = arith.constant 0 : i32
    %c0_i32_0 = arith.constant 0 : i32
    %c0_i32_1 = arith.constant 0 : i32
    return %c0_i32, %c0_i32_0 : i32, i32
  }
  func.func @transform_2(%arg0: i32) -> (i32, i32) {
    %c0_i32 = arith.constant 0 : i32
    %c0_i32_0 = arith.constant 0 : i32
    %c0_i32_1 = arith.constant 0 : i32
    return %c0_i32, %c0_i32_0 : i32, i32
  }
  func.func @transform_3(%arg0: i32) -> (i32, i32) {
    %c0_i32 = arith.constant 0 : i32
    %c0_i32_0 = arith.constant 0 : i32
    %c0_i32_1 = arith.constant 0 : i32
    return %c0_i32, %c0_i32_0 : i32, i32
  }
  func.func @transform_4(%arg0: i32) -> (i32, i32) {
    %c0_i32 = arith.constant 0 : i32
    %c0_i32_0 = arith.constant 0 : i32
    %c0_i32_1 = arith.constant 0 : i32
    return %c0_i32, %c0_i32_0 : i32, i32
  }
  func.func @transform_5(%arg0: i32) -> (i32, i32) {
    %c0_i32 = arith.constant 0 : i32
    %c0_i32_0 = arith.constant 0 : i32
    %c0_i32_1 = arith.constant 0 : i32
    return %c0_i32, %c0_i32_0 : i32, i32
  }
  func.func @transform_6(%arg0: i32) -> (i32, i32) {
    %c0_i32 = arith.constant 0 : i32
    %c0_i32_0 = arith.constant 0 : i32
    %c0_i32_1 = arith.constant 0 : i32
    return %c0_i32, %c0_i32_0 : i32, i32
  }
  func.func @transform_7(%arg0: i32) -> (i32, i32) {
    %c0_i32 = arith.constant 0 : i32
    %c0_i32_0 = arith.constant 0 : i32
    return %arg0, %c0_i32 : i32, i32
  }
}

</mosaic_0001>

<llo_original>
// kernel: tpu_custom_call.1
$region0: #{tpu_custom_call.1}
  #allocation0 [shape = 'u32[]', space=smem, size = 0x4, offset = 0x4, fixed_abs, tag = 'smem constant byte address 0x4 - core index']
  #allocation1 [shape = 'u32[144,128]{1,0:T(1,128)}', space=vmem, size = 0x12000, scoped, tag = 'internal scratch']
  #allocation2 [shape = 'bf16[16,896]{1,0:T(8,128)(2,1)}', space=vmem, size = 0x7000, scoped, tag = 'scratch operand']
  %s0 = inlined_call_operand.hbm [shape: f32[16,784], index: 0, kind: input, shape index: {}]
  %s1 = inlined_call_operand.hbm [shape: bf16[896,512], index: 1, kind: input, shape index: {}]
  %s2 = inlined_call_operand.hbm [shape: f32[1,512], index: 2, kind: input, shape index: {}]
  %s3 = inlined_call_operand.hbm [shape: bf16[512,512], index: 3, kind: input, shape index: {}]
  %s4 = inlined_call_operand.vmem [shape: f32[1,512], index: 4, kind: input, shape index: {}]
  %s5 = inlined_call_operand.hbm [shape: bf16[512,128], index: 5, kind: input, shape index: {}]
  %s6 = inlined_call_operand.vmem [shape: f32[1,128], index: 6, kind: input, shape index: {}]
  %s7 = inlined_call_operand.hbm [shape: f32[16,128], index: 7, kind: output, shape index: {}]
  %s8 = sld [smem:[#allocation0]]
  $region58: #{tpu_custom_call.1} parent=0
    _
  %s10 = ssub.s32 1, %s8
  %s11 = scalar_select 0, %s10, %s8
  $region1: #{tpu_custom_call.1} parent=0
    #allocation3 [shape = 'u8[57344]{0}', space=vmem, size = 0xe000, scoped, tag = 'input window, operand 0, single buffered']
    #allocation4 [shape = 's32[1]{0}', space=sflag, size = 0x4, scoped, tag = 'scoped memory for tpu_custom_call.1']
    #allocation5 [shape = 's32[1]{0}', space=sflag, size = 0x4, scoped, tag = 'scoped memory for tpu_custom_call.1']
    #allocation6 [shape = 'u8[917504]{0}', space=vmem, size = 0xe0000, scoped, tag = 'input window, operand 1, single buffered']
    #allocation7 [shape = 's32[1]{0}', space=sflag, size = 0x4, scoped, tag = 'scoped memory for tpu_custom_call.1']
    #allocation8 [shape = 'u8[2048]{0}', space=vmem, size = 0x800, scoped, tag = 'input window, operand 2, single buffered']
    #allocation9 [shape = 'u8[524288]{0}', space=vmem, size = 0x80000, scoped, tag = 'input window, operand 3, single buffered']
    #allocation10 [shape = 's32[1]{0}', space=sflag, size = 0x4, scoped, tag = 'scoped memory for tpu_custom_call.1']
    #allocation11 [shape = 'u8[131072]{0}', space=vmem, size = 0x20000, scoped, tag = 'input window, operand 5, single buffered']
    #allocation12 [shape = 'u8[8192]{0}', space=vmem, size = 0x2000, scoped, tag = 'output window, operand 0, single buffered']
    %12 = vsyncpa [#allocation4], 0
    %13 = vsyncpa [#allocation7], 0
    %14 = vsyncpa [#allocation10], 0
    %15 = vsyncpa [#allocation5], 0
    // Predicated region
    $region2: #{tpu_custom_call.1} parent=1 // pred_check
      _
    $region3: #{tpu_custom_call.1} parent=1 // pred_check_branch
      %17 = sbr.rel (0) target = $region5
    $region4: #{tpu_custom_call.1} parent=1 // pred_region
      %s19 = ssub.s32 1792, 1792
      %20 = vsyncadd [#allocation4], %s19
      %s21 = sshll.u32 [#allocation3], 4
      %s22 = int_to_ptr.vmem [resolvable:$true] %s21
      %27 = dma.hbm_to_vmem [thread:$0]  %s0, 1792, %s22, [#allocation4], 896, 896, 56
    $region5: #{tpu_custom_call.1} parent=1 // pred_fallthru
      _
    // Predicated region
    $region6: #{tpu_custom_call.1} parent=1 // pred_check
      _
    $region7: #{tpu_custom_call.1} parent=1 // pred_check_branch
      %29 = sbr.rel (0) target = $region9
    $region8: #{tpu_custom_call.1} parent=1 // pred_region
      %s31 = ssub.s32 28672, 28672
      %32 = vsyncadd [#allocation7], %s31
      %s33 = sshll.u32 [#allocation6], 4
      %s34 = int_to_ptr.vmem [resolvable:$true] %s33
      %39 = dma.hbm_to_vmem [thread:$0]  %s1, 28672, %s34, [#allocation7], 256, 256, 16
    $region9: #{tpu_custom_call.1} parent=1 // pred_fallthru
      _
    // Predicated region
    $region10: #{tpu_custom_call.1} parent=1 // pred_check
      _
    $region11: #{tpu_custom_call.1} parent=1 // pred_check_branch
      %41 = sbr.rel (0) target = $region13
    $region12: #{tpu_custom_call.1} parent=1 // pred_region
      %s43 = ssub.s32 64, 64
      %44 = vsyncadd [#allocation7], %s43
      %s46 = sshll.u32 [#allocation8], 4
      %s47 = int_to_ptr.vmem [resolvable:$true] %s46
      %49 = dma.hbm_to_vmem [thread:$0]  %s2, 64, %s47, [#allocation7]
    $region13: #{tpu_custom_call.1} parent=1 // pred_fallthru
      _
    // Predicated region
    $region14: #{tpu_custom_call.1} parent=1 // pred_check
      _
    $region15: #{tpu_custom_call.1} parent=1 // pred_check_branch
      %51 = sbr.rel (0) target = $region17
    $region16: #{tpu_custom_call.1} parent=1 // pred_region
      %s53 = ssub.s32 16384, 16384
      %54 = vsyncadd [#allocation10], %s53
      %s55 = sshll.u32 [#allocation9], 4
      %s56 = int_to_ptr.vmem [resolvable:$true] %s55
      %61 = dma.hbm_to_vmem [thread:$0]  %s3, 16384, %s56, [#allocation10], 256, 256, 16
    $region17: #{tpu_custom_call.1} parent=1 // pred_fallthru
      _
    // Predicated region
    $region18: #{tpu_custom_call.1} parent=1 // pred_check
      _
    $region19: #{tpu_custom_call.1} parent=1 // pred_check_branch
      %63 = sbr.rel (0) target = $region21
    $region20: #{tpu_custom_call.1} parent=1 // pred_region
      _
    $region21: #{tpu_custom_call.1} parent=1 // pred_fallthru
      _
    // Predicated region
    $region22: #{tpu_custom_call.1} parent=1 // pred_check
      _
    $region23: #{tpu_custom_call.1} parent=1 // pred_check_branch
      %65 = sbr.rel (0) target = $region25
    $region24: #{tpu_custom_call.1} parent=1 // pred_region
      %s67 = ssub.s32 4096, 4096
      %68 = vsyncadd [#allocation10], %s67
      %s69 = sshll.u32 [#allocation11], 4
      %s70 = int_to_ptr.vmem [resolvable:$true] %s69
      %75 = dma.hbm_to_vmem [thread:$0]  %s5, 4096, %s70, [#allocation10], 64, 64, 4
    $region25: #{tpu_custom_call.1} parent=1 // pred_fallthru
      _
    // Predicated region
    $region26: #{tpu_custom_call.1} parent=1 // pred_check
      _
    $region27: #{tpu_custom_call.1} parent=1 // pred_check_branch
      %77 = sbr.rel (0) target = $region29
    $region28: #{tpu_custom_call.1} parent=1 // pred_region
      _
    $region29: #{tpu_custom_call.1} parent=1 // pred_fallthru
      _
    // Predicated region
    $region30: #{tpu_custom_call.1} parent=1 // pred_check
      _
    $region31: #{tpu_custom_call.1} parent=1 // pred_check_branch
      %79 = sbr.rel (0) target = $region33
    $region32: #{tpu_custom_call.1} parent=1 // pred_region
      %80 = dma.done [#allocation4], 1792
    $region33: #{tpu_custom_call.1} parent=1 // pred_fallthru
      _
    // Predicated region
    $region34: #{tpu_custom_call.1} parent=1 // pred_check
      _
    $region35: #{tpu_custom_call.1} parent=1 // pred_check_branch
      %82 = sbr.rel (0) target = $region37
    $region36: #{tpu_custom_call.1} parent=1 // pred_region
      %83 = dma.done [#allocation7], 28672
    $region37: #{tpu_custom_call.1} parent=1 // pred_fallthru
      _
    // Predicated region
    $region38: #{tpu_custom_call.1} parent=1 // pred_check
      _
    $region39: #{tpu_custom_call.1} parent=1 // pred_check_branch
      %85 = sbr.rel (0) target = $region41
    $region40: #{tpu_custom_call.1} parent=1 // pred_region
      %86 = dma.done [#allocation7], 64
    $region41: #{tpu_custom_call.1} parent=1 // pred_fallthru
      _
    // Predicated region
    $region42: #{tpu_custom_call.1} parent=1 // pred_check
      _
    $region43: #{tpu_custom_call.1} parent=1 // pred_check_branch
      %88 = sbr.rel (0) target = $region45
    $region44: #{tpu_custom_call.1} parent=1 // pred_region
      %89 = dma.done [#allocation10], 16384
    $region45: #{tpu_custom_call.1} parent=1 // pred_fallthru
      _
    // Predicated region
    $region46: #{tpu_custom_call.1} parent=1 // pred_check
      _
    $region47: #{tpu_custom_call.1} parent=1 // pred_check_branch
      %91 = sbr.rel (0) target = $region49
    $region48: #{tpu_custom_call.1} parent=1 // pred_region
      %92 = dma.done [#allocation10], 4096
    $region49: #{tpu_custom_call.1} parent=1 // pred_fallthru
      _
    %94 = vst [vmem:[#allocation2] sm:$0xff] 0
    %95 = vst [vmem:[#allocation2 + $0x8] sm:$0xff] 0
    %96 = vst [vmem:[#allocation2 + $0x10] sm:$0xff] 0
    %97 = vst [vmem:[#allocation2 + $0x18] sm:$0xf] 0
    %98 = vst [vmem:[#allocation2 + $0x1c] sm:$0xff] 0
    %99 = vst [vmem:[#allocation2 + $0x24] sm:$0xff] 0
    %100 = vst [vmem:[#allocation2 + $0x2c] sm:$0xff] 0
    %101 = vst [vmem:[#allocation2 + $0x34] sm:$0xf] 0
    %v102 = vld [vmem:[#allocation3] sm:$0xff]
    %v103 = vld [vmem:[#allocation3 + $0x8] sm:$0xff]
    %v104 = vld [vmem:[#allocation3 + $0x10] sm:$0xff]
    %v105 = vld [vmem:[#allocation3 + $0x18] sm:$0xff]
    %v106 = vld [vmem:[#allocation3 + $0x20] sm:$0xff]
    %v107 = vld [vmem:[#allocation3 + $0x28] sm:$0xff]
    %v108 = vld [vmem:[#allocation3 + $0x30] sm:$0xff]
    %v109 = vld [vmem:[#allocation3 + $0x38] sm:$0xff]
    %v110 = vld [vmem:[#allocation3 + $0x40] sm:$0xff]
    %v111 = vld [vmem:[#allocation3 + $0x48] sm:$0xff]
    %v112 = vld [vmem:[#allocation3 + $0x50] sm:$0xff]
    %v113 = vld [vmem:[#allocation3 + $0x58] sm:$0xff]
    %v114 = vld [vmem:[#allocation3 + $0x60] sm:$0xff]
    %v115 = vld [vmem:[#allocation3 + $0x68] sm:$0xff]
    %v116 = vpack.c.bf16 %v109, %v102
    %v117 = vpack.c.bf16 %v110, %v103
    %v118 = vpack.c.bf16 %v111, %v104
    %v119 = vpack.c.bf16 %v112, %v105
    %v120 = vpack.c.bf16 %v113, %v106
    %v121 = vpack.c.bf16 %v114, %v107
    %v122 = vpack.c.bf16 %v115, %v108
    %v130 = vunpack.c.l.b16 %v116
    %v131 = vunpack.c.l.b16 %v117
    %v132 = vunpack.c.l.b16 %v118
    %v133 = vunpack.c.l.b16 %v119
    %v134 = vunpack.c.l.b16 %v120
    %v135 = vunpack.c.l.b16 %v121
    %v136 = vunpack.c.l.b16 %v122
    %v137 = vunpack.c.h.b16 %v116
    %v138 = vunpack.c.h.b16 %v117
    %v139 = vunpack.c.h.b16 %v118
    %v140 = vunpack.c.h.b16 %v119
    %v141 = vunpack.c.h.b16 %v120
    %v142 = vunpack.c.h.b16 %v121
    %v143 = vunpack.c.h.b16 %v122
    %v144 = vpack.c.b16 %v131, %v130
    %v145 = vpack.c.b16 %v133, %v132
    %v146 = vpack.c.b16 %v135, %v134
    %v147 = vpack.c.b16 %v136, %v136
    %v148 = vpack.c.b16 %v138, %v137
    %v149 = vpack.c.b16 %v140, %v139
    %v150 = vpack.c.b16 %v142, %v141
    %v151 = vpack.c.b16 %v143, %v143
    %160 = vst [vmem:[#allocation2] sm:$0xff] %v144
    %161 = vst [vmem:[#allocation2 + $0x8] sm:$0xff] %v145
    %162 = vst [vmem:[#allocation2 + $0x10] sm:$0xff] %v146
    %vm163 = vcmask 125952
    %164 = vst.msk [vmem:[#allocation2 + $0x18] sm:$0xf] %vm163, %v147
    %165 = vst [vmem:[#allocation2 + $0x1c] sm:$0xff] %v148
    %166 = vst [vmem:[#allocation2 + $0x24] sm:$0xff] %v149
    %167 = vst [vmem:[#allocation2 + $0x2c] sm:$0xff] %v150
    %168 = vst.msk [vmem:[#allocation2 + $0x34] sm:$0xf] %vm163, %v151
    %v169 = vld [vmem:[#allocation2] sm:$0xff]
    %v170 = vld [vmem:[#allocation2 + $0x8] sm:$0xff]
    %v171 = vld [vmem:[#allocation2 + $0x10] sm:$0xff]
    %v172 = vld [vmem:[#allocation2 + $0x18] sm:$0xf]
    %v173 = vld [vmem:[#allocation2 + $0x1c] sm:$0xff]
    %v174 = vld [vmem:[#allocation2 + $0x24] sm:$0xff]
    %v175 = vld [vmem:[#allocation2 + $0x2c] sm:$0xff]
    %v176 = vld [vmem:[#allocation2 + $0x34] sm:$0xf]
    %v177 = vld [vmem:[#allocation6] sm:$0xff]
    %v178 = vld [vmem:[#allocation6 + $0x8] sm:$0xff]
    %v179 = vld [vmem:[#allocation6 + $0x10] sm:$0xff]
    %v180 = vld [vmem:[#allocation6 + $0x18] sm:$0xff]
    %v181 = vld [vmem:[#allocation6 + $0x20] sm:$0xff]
    %v182 = vld [vmem:[#allocation6 + $0x28] sm:$0xff]
    %v183 = vld [vmem:[#allocation6 + $0x30] sm:$0xff]
    %v184 = vld [vmem:[#allocation6 + $0x38] sm:$0xff]
    %v185 = vld [vmem:[#allocation6 + $0x40] sm:$0xff]
    %v186 = vld [vmem:[#allocation6 + $0x48] sm:$0xff]
    %v187 = vld [vmem:[#allocation6 + $0x50] sm:$0xff]
    %v188 = vld [vmem:[#allocation6 + $0x58] sm:$0xff]
    %v189 = vld [vmem:[#allocation6 + $0x60] sm:$0xff]
    %v190 = vld [vmem:[#allocation6 + $0x68] sm:$0xff]
    %v191 = vld [vmem:[#allocation6 + $0x70] sm:$0xff]
    %v192 = vld [vmem:[#allocation6 + $0x78] sm:$0xff]
    %v193 = vld [vmem:[#allocation6 + $0x80] sm:$0xff]
    %v194 = vld [vmem:[#allocation6 + $0x88] sm:$0xff]
    %v195 = vld [vmem:[#allocation6 + $0x90] sm:$0xff]
    %v196 = vld [vmem:[#allocation6 + $0x98] sm:$0xff]
    %v197 = vld [vmem:[#allocation6 + $0xa0] sm:$0xff]
    %v198 = vld [vmem:[#allocation6 + $0xa8] sm:$0xff]
    %v199 = vld [vmem:[#allocation6 + $0xb0] sm:$0xff]
    %v200 = vld [vmem:[#allocation6 + $0xb8] sm:$0xff]
    %v201 = vld [vmem:[#allocation6 + $0xc0] sm:$0xff]
    %v202 = vld [vmem:[#allocation6 + $0xc8] sm:$0xff]
    %v203 = vld [vmem:[#allocation6 + $0xd0] sm:$0xff]
    %v204 = vld [vmem:[#allocation6 + $0xd8] sm:$0xff]
    %v205 = vld [vmem:[#allocation6 + $0xe0] sm:$0xff]
    %v206 = vld [vmem:[#allocation6 + $0xe8] sm:$0xff]
    %v207 = vld [vmem:[#allocation6 + $0xf0] sm:$0xff]
    %v208 = vld [vmem:[#allocation6 + $0xf8] sm:$0xff]
    %v209 = vld [vmem:[#allocation6 + $0x100] sm:$0xff]
    %v210 = vld [vmem:[#allocation6 + $0x108] sm:$0xff]
    %v211 = vld [vmem:[#allocation6 + $0x110] sm:$0xff]
    %v212 = vld [vmem:[#allocation6 + $0x118] sm:$0xff]
    %v213 = vld [vmem:[#allocation6 + $0x120] sm:$0xff]
    %v214 = vld [vmem:[#allocation6 + $0x128] sm:$0xff]
    %v215 = vld [vmem:[#allocation6 + $0x130] sm:$0xff]
    %v216 = vld [vmem:[#allocation6 + $0x138] sm:$0xff]
    %v217 = vld [vmem:[#allocation6 + $0x140] sm:$0xff]
    %v218 = vld [vmem:[#allocation6 + $0x148] sm:$0xff]
    %v219 = vld [vmem:[#allocation6 + $0x150] sm:$0xff]
    %v220 = vld [vmem:[#allocation6 + $0x158] sm:$0xff]
    %v221 = vld [vmem:[#allocation6 + $0x160] sm:$0xff]
    %v222 = vld [vmem:[#allocation6 + $0x168] sm:$0xff]
    %v223 = vld [vmem:[#allocation6 + $0x170] sm:$0xff]
    %v224 = vld [vmem:[#allocation6 + $0x178] sm:$0xff]
    %v225 = vld [vmem:[#allocation6 + $0x180] sm:$0xff]
    %v226 = vld [vmem:[#allocation6 + $0x188] sm:$0xff]
    %v227 = vld [vmem:[#allocation6 + $0x190] sm:$0xff]
    %v228 = vld [vmem:[#allocation6 + $0x198] sm:$0xff]
    %v229 = vld [vmem:[#allocation6 + $0x1a0] sm:$0xff]
    %v230 = vld [vmem:[#allocation6 + $0x1a8] sm:$0xff]
    %v231 = vld [vmem:[#allocation6 + $0x1b0] sm:$0xff]
    %v232 = vld [vmem:[#allocation6 + $0x1b8] sm:$0xff]
    %v233 = vld [vmem:[#allocation6 + $0x1c0] sm:$0xff]
    %v234 = vld [vmem:[#allocation6 + $0x1c8] sm:$0xff]
    %v235 = vld [vmem:[#allocation6 + $0x1d0] sm:$0xff]
    %v236 = vld [vmem:[#allocation6 + $0x1d8] sm:$0xff]
    %v237 = vld [vmem:[#allocation6 + $0x1e0] sm:$0xff]
    %v238 = vld [vmem:[#allocation6 + $0x1e8] sm:$0xff]
    %v239 = vld [vmem:[#allocation6 + $0x1f0] sm:$0xff]
    %v240 = vld [vmem:[#allocation6 + $0x1f8] sm:$0xff]
    %v241 = vld [vmem:[#allocation6 + $0x200] sm:$0xff]
    %v242 = vld [vmem:[#allocation6 + $0x208] sm:$0xff]
    %v243 = vld [vmem:[#allocation6 + $0x210] sm:$0xff]
    %v244 = vld [vmem:[#allocation6 + $0x218] sm:$0xff]
    %v245 = vld [vmem:[#allocation6 + $0x220] sm:$0xff]
    %v246 = vld [vmem:[#allocation6 + $0x228] sm:$0xff]
    %v247 = vld [vmem:[#allocation6 + $0x230] sm:$0xff]
    %v248 = vld [vmem:[#allocation6 + $0x238] sm:$0xff]
    %v249 = vld [vmem:[#allocation6 + $0x240] sm:$0xff]
    %v250 = vld [vmem:[#allocation6 + $0x248] sm:$0xff]
    %v251 = vld [vmem:[#allocation6 + $0x250] sm:$0xff]
    %v252 = vld [vmem:[#allocation6 + $0x258] sm:$0xff]
    %v253 = vld [vmem:[#allocation6 + $0x260] sm:$0xff]
    %v254 = vld [vmem:[#allocation6 + $0x268] sm:$0xff]
    %v255 = vld [vmem:[#allocation6 + $0x270] sm:$0xff]
    %v256 = vld [vmem:[#allocation6 + $0x278] sm:$0xff]
    %v257 = vld [vmem:[#allocation6 + $0x280] sm:$0xff]
    %v258 = vld [vmem:[#allocation6 + $0x288] sm:$0xff]
    %v259 = vld [vmem:[#allocation6 + $0x290] sm:$0xff]
    %v260 = vld [vmem:[#allocation6 + $0x298] sm:$0xff]
    %v261 = vld [vmem:[#allocation6 + $0x2a0] sm:$0xff]
    %v262 = vld [vmem:[#allocation6 + $0x2a8] sm:$0xff]
    %v263 = vld [vmem:[#allocation6 + $0x2b0] sm:$0xff]
    %v264 = vld [vmem:[#allocation6 + $0x2b8] sm:$0xff]
    %v265 = vld [vmem:[#allocation6 + $0x2c0] sm:$0xff]
    %v266 = vld [vmem:[#allocation6 + $0x2c8] sm:$0xff]
    %v267 = vld [vmem:[#allocation6 + $0x2d0] sm:$0xff]
    %v268 = vld [vmem:[#allocation6 + $0x2d8] sm:$0xff]
    %v269 = vld [vmem:[#allocation6 + $0x2e0] sm:$0xff]
    %v270 = vld [vmem:[#allocation6 + $0x2e8] sm:$0xff]
    %v271 = vld [vmem:[#allocation6 + $0x2f0] sm:$0xff]
    %v272 = vld [vmem:[#allocation6 + $0x2f8] sm:$0xff]
    %v273 = vld [vmem:[#allocation6 + $0x300] sm:$0xff]
    %v274 = vld [vmem:[#allocation6 + $0x308] sm:$0xff]
    %v275 = vld [vmem:[#allocation6 + $0x310] sm:$0xff]
    %v276 = vld [vmem:[#allocation6 + $0x318] sm:$0xff]
    %v277 = vld [vmem:[#allocation6 + $0x320] sm:$0xff]
    %v278 = vld [vmem:[#allocation6 + $0x328] sm:$0xff]
    %v279 = vld [vmem:[#allocation6 + $0x330] sm:$0xff]
    %v280 = vld [vmem:[#allocation6 + $0x338] sm:$0xff]
    %v281 = vld [vmem:[#allocation6 + $0x340] sm:$0xff]
    %v282 = vld [vmem:[#allocation6 + $0x348] sm:$0xff]
    %v283 = vld [vmem:[#allocation6 + $0x350] sm:$0xff]
    %v284 = vld [vmem:[#allocation6 + $0x358] sm:$0xff]
    %v285 = vld [vmem:[#allocation6 + $0x360] sm:$0xff]
    %v286 = vld [vmem:[#allocation6 + $0x368] sm:$0xff]
    %v287 = vld [vmem:[#allocation6 + $0x370] sm:$0xff]
    %v288 = vld [vmem:[#allocation6 + $0x378] sm:$0xff]
    %v289 = vld [vmem:[#allocation6 + $0x380] sm:$0xff]
    %v290 = vld [vmem:[#allocation6 + $0x388] sm:$0xff]
    %v291 = vld [vmem:[#allocation6 + $0x390] sm:$0xff]
    %v292 = vld [vmem:[#allocation6 + $0x398] sm:$0xff]
    %v293 = vld [vmem:[#allocation6 + $0x3a0] sm:$0xff]
    %v294 = vld [vmem:[#allocation6 + $0x3a8] sm:$0xff]
    %v295 = vld [vmem:[#allocation6 + $0x3b0] sm:$0xff]
    %v296 = vld [vmem:[#allocation6 + $0x3b8] sm:$0xff]
    %v297 = vld [vmem:[#allocation6 + $0x3c0] sm:$0xff]
    %v298 = vld [vmem:[#allocation6 + $0x3c8] sm:$0xff]
    %v299 = vld [vmem:[#allocation6 + $0x3d0] sm:$0xff]
    %v300 = vld [vmem:[#allocation6 + $0x3d8] sm:$0xff]
    %v301 = vld [vmem:[#allocation6 + $0x3e0] sm:$0xff]
    %v302 = vld [vmem:[#allocation6 + $0x3e8] sm:$0xff]
    %v303 = vld [vmem:[#allocation6 + $0x3f0] sm:$0xff]
    %v304 = vld [vmem:[#allocation6 + $0x3f8] sm:$0xff]
    %v305 = vld [vmem:[#allocation6 + $0x400] sm:$0xff]
    %v306 = vld [vmem:[#allocation6 + $0x408] sm:$0xff]
    %v307 = vld [vmem:[#allocation6 + $0x410] sm:$0xff]
    %v308 = vld [vmem:[#allocation6 + $0x418] sm:$0xff]
    %v309 = vld [vmem:[#allocation6 + $0x420] sm:$0xff]
    %v310 = vld [vmem:[#allocation6 + $0x428] sm:$0xff]
    %v311 = vld [vmem:[#allocation6 + $0x430] sm:$0xff]
    %v312 = vld [vmem:[#allocation6 + $0x438] sm:$0xff]
    %v313 = vld [vmem:[#allocation6 + $0x440] sm:$0xff]
    %v314 = vld [vmem:[#allocation6 + $0x448] sm:$0xff]
    %v315 = vld [vmem:[#allocation6 + $0x450] sm:$0xff]
    %v316 = vld [vmem:[#allocation6 + $0x458] sm:$0xff]
    %v317 = vld [vmem:[#allocation6 + $0x460] sm:$0xff]
    %v318 = vld [vmem:[#allocation6 + $0x468] sm:$0xff]
    %v319 = vld [vmem:[#allocation6 + $0x470] sm:$0xff]
    %v320 = vld [vmem:[#allocation6 + $0x478] sm:$0xff]
    %v321 = vld [vmem:[#allocation6 + $0x480] sm:$0xff]
    %v322 = vld [vmem:[#allocation6 + $0x488] sm:$0xff]
    %v323 = vld [vmem:[#allocation6 + $0x490] sm:$0xff]
    %v324 = vld [vmem:[#allocation6 + $0x498] sm:$0xff]
    %v325 = vld [vmem:[#allocation6 + $0x4a0] sm:$0xff]
    %v326 = vld [vmem:[#allocation6 + $0x4a8] sm:$0xff]
    %v327 = vld [vmem:[#allocation6 + $0x4b0] sm:$0xff]
    %v328 = vld [vmem:[#allocation6 + $0x4b8] sm:$0xff]
    %v329 = vld [vmem:[#allocation6 + $0x4c0] sm:$0xff]
    %v330 = vld [vmem:[#allocation6 + $0x4c8] sm:$0xff]
    %v331 = vld [vmem:[#allocation6 + $0x4d0] sm:$0xff]
    %v332 = vld [vmem:[#allocation6 + $0x4d8] sm:$0xff]
    %v333 = vld [vmem:[#allocation6 + $0x4e0] sm:$0xff]
    %v334 = vld [vmem:[#allocation6 + $0x4e8] sm:$0xff]
    %v335 = vld [vmem:[#allocation6 + $0x4f0] sm:$0xff]
    %v336 = vld [vmem:[#allocation6 + $0x4f8] sm:$0xff]
    %v337 = vld [vmem:[#allocation6 + $0x500] sm:$0xff]
    %v338 = vld [vmem:[#allocation6 + $0x508] sm:$0xff]
    %v339 = vld [vmem:[#allocation6 + $0x510] sm:$0xff]
    %v340 = vld [vmem:[#allocation6 + $0x518] sm:$0xff]
    %v341 = vld [vmem:[#allocation6 + $0x520] sm:$0xff]
    %v342 = vld [vmem:[#allocation6 + $0x528] sm:$0xff]
    %v343 = vld [vmem:[#allocation6 + $0x530] sm:$0xff]
    %v344 = vld [vmem:[#allocation6 + $0x538] sm:$0xff]
    %v345 = vld [vmem:[#allocation6 + $0x540] sm:$0xff]
    %v346 = vld [vmem:[#allocation6 + $0x548] sm:$0xff]
    %v347 = vld [vmem:[#allocation6 + $0x550] sm:$0xff]
    %v348 = vld [vmem:[#allocation6 + $0x558] sm:$0xff]
    %v349 = vld [vmem:[#allocation6 + $0x560] sm:$0xff]
    %v350 = vld [vmem:[#allocation6 + $0x568] sm:$0xff]
    %v351 = vld [vmem:[#allocation6 + $0x570] sm:$0xff]
    %v352 = vld [vmem:[#allocation6 + $0x578] sm:$0xff]
    %v353 = vld [vmem:[#allocation6 + $0x580] sm:$0xff]
    %v354 = vld [vmem:[#allocation6 + $0x588] sm:$0xff]
    %v355 = vld [vmem:[#allocation6 + $0x590] sm:$0xff]
    %v356 = vld [vmem:[#allocation6 + $0x598] sm:$0xff]
    %v357 = vld [vmem:[#allocation6 + $0x5a0] sm:$0xff]
    %v358 = vld [vmem:[#allocation6 + $0x5a8] sm:$0xff]
    %v359 = vld [vmem:[#allocation6 + $0x5b0] sm:$0xff]
    %v360 = vld [vmem:[#allocation6 + $0x5b8] sm:$0xff]
    %v361 = vld [vmem:[#allocation6 + $0x5c0] sm:$0xff]
    %v362 = vld [vmem:[#allocation6 + $0x5c8] sm:$0xff]
    %v363 = vld [vmem:[#allocation6 + $0x5d0] sm:$0xff]
    %v364 = vld [vmem:[#allocation6 + $0x5d8] sm:$0xff]
    %v365 = vld [vmem:[#allocation6 + $0x5e0] sm:$0xff]
    %v366 = vld [vmem:[#allocation6 + $0x5e8] sm:$0xff]
    %v367 = vld [vmem:[#allocation6 + $0x5f0] sm:$0xff]
    %v368 = vld [vmem:[#allocation6 + $0x5f8] sm:$0xff]
    %v369 = vld [vmem:[#allocation6 + $0x600] sm:$0xff]
    %v370 = vld [vmem:[#allocation6 + $0x608] sm:$0xff]
    %v371 = vld [vmem:[#allocation6 + $0x610] sm:$0xff]
    %v372 = vld [vmem:[#allocation6 + $0x618] sm:$0xff]
    %v373 = vld [vmem:[#allocation6 + $0x620] sm:$0xff]
    %v374 = vld [vmem:[#allocation6 + $0x628] sm:$0xff]
    %v375 = vld [vmem:[#allocation6 + $0x630] sm:$0xff]
    %v376 = vld [vmem:[#allocation6 + $0x638] sm:$0xff]
    %v377 = vld [vmem:[#allocation6 + $0x640] sm:$0xff]
    %v378 = vld [vmem:[#allocation6 + $0x648] sm:$0xff]
    %v379 = vld [vmem:[#allocation6 + $0x650] sm:$0xff]
    %v380 = vld [vmem:[#allocation6 + $0x658] sm:$0xff]
    %v381 = vld [vmem:[#allocation6 + $0x660] sm:$0xff]
    %v382 = vld [vmem:[#allocation6 + $0x668] sm:$0xff]
    %v383 = vld [vmem:[#allocation6 + $0x670] sm:$0xff]
    %v384 = vld [vmem:[#allocation6 + $0x678] sm:$0xff]
    %v385 = vld [vmem:[#allocation6 + $0x680] sm:$0xff]
    %v386 = vld [vmem:[#allocation6 + $0x688] sm:$0xff]
    %v387 = vld [vmem:[#allocation6 + $0x690] sm:$0xff]
    %v388 = vld [vmem:[#allocation6 + $0x698] sm:$0xff]
    %v389 = vld [vmem:[#allocation6 + $0x6a0] sm:$0xff]
    %v390 = vld [vmem:[#allocation6 + $0x6a8] sm:$0xff]
    %v391 = vld [vmem:[#allocation6 + $0x6b0] sm:$0xff]
    %v392 = vld [vmem:[#allocation6 + $0x6b8] sm:$0xff]
    %v393 = vld [vmem:[#allocation6 + $0x6c0] sm:$0xff]
    %v394 = vld [vmem:[#allocation6 + $0x6c8] sm:$0xff]
    %v395 = vld [vmem:[#allocation6 + $0x6d0] sm:$0xff]
    %v396 = vld [vmem:[#allocation6 + $0x6d8] sm:$0xff]
    %v397 = vld [vmem:[#allocation6 + $0x6e0] sm:$0xff]
    %v398 = vld [vmem:[#allocation6 + $0x6e8] sm:$0xff]
    %v399 = vld [vmem:[#allocation6 + $0x6f0] sm:$0xff]
    %v400 = vld [vmem:[#allocation6 + $0x6f8] sm:$0xff]
    %v401 = vld [vmem:[#allocation8] sm:$0xf]
    %v403 = vlaneseq
    %v404 = vshrl.u32 %v403, 7
    %v405 = vsub.s32 0, %v404
    %v406 = vrot.slane %v401, %v405
    %v407 = vlaneseq
    %v408 = vshrl.u32 %v407, 7
    %v409 = vsub.s32 1, %v408
    %v410 = vrot.slane %v401, %v409
    %v411 = vlaneseq
    %v412 = vshrl.u32 %v411, 7
    %v413 = vsub.s32 2, %v412
    %v414 = vrot.slane %v401, %v413
    %v415 = vlaneseq
    %v416 = vshrl.u32 %v415, 7
    %v417 = vsub.s32 3, %v416
    %v418 = vrot.slane %v401, %v417
    %v431 = vunpack.c.l.b16 %v169
    %v432 = vunpack.c.h.b16 %v169
    %v433 = vunpack.c.l.b16 %v170
    %v434 = vunpack.c.h.b16 %v170
    %v435 = vunpack.c.l.b16 %v171
    %v436 = vunpack.c.h.b16 %v171
    %v437 = vunpack.c.l.b16 %v172
    %v438 = vunpack.c.l.b16 %v173
    %v439 = vunpack.c.h.b16 %v173
    %v440 = vunpack.c.l.b16 %v174
    %v441 = vunpack.c.h.b16 %v174
    %v442 = vunpack.c.l.b16 %v175
    %v443 = vunpack.c.h.b16 %v175
    %v444 = vunpack.c.l.b16 %v176
    %v445 = vpack.c.b16 %v438, %v431
    %v446 = vpack.c.b16 %v439, %v432
    %v447 = vpack.c.b16 %v440, %v433
    %v448 = vpack.c.b16 %v441, %v434
    %v449 = vpack.c.b16 %v442, %v435
    %v450 = vpack.c.b16 %v443, %v436
    %v451 = vpack.c.b16 %v444, %v437
    %v683 = vunpack.c.l.b16 %v177
    %v684 = vunpack.c.h.b16 %v177
    %v685 = vunpack.c.l.b16 %v178
    %v686 = vunpack.c.h.b16 %v178
    %v687 = vunpack.c.l.b16 %v179
    %v688 = vunpack.c.h.b16 %v179
    %v689 = vunpack.c.l.b16 %v180
    %v690 = vunpack.c.h.b16 %v180
    %v691 = vunpack.c.l.b16 %v181
    %v692 = vunpack.c.h.b16 %v181
    %v693 = vunpack.c.l.b16 %v182
    %v694 = vunpack.c.h.b16 %v182
    %v695 = vunpack.c.l.b16 %v183
    %v696 = vunpack.c.h.b16 %v183
    %v697 = vunpack.c.l.b16 %v184
    %v698 = vunpack.c.h.b16 %v184
    %v699 = vunpack.c.l.b16 %v185
    %v700 = vunpack.c.h.b16 %v185
    %v701 = vunpack.c.l.b16 %v186
    %v702 = vunpack.c.h.b16 %v186
    %v703 = vunpack.c.l.b16 %v187
    %v704 = vunpack.c.h.b16 %v187
    %v705 = vunpack.c.l.b16 %v188
    %v706 = vunpack.c.h.b16 %v188
    %v707 = vunpack.c.l.b16 %v189
    %v708 = vunpack.c.h.b16 %v189
    %v709 = vunpack.c.l.b16 %v190
    %v710 = vunpack.c.h.b16 %v190
    %v711 = vunpack.c.l.b16 %v191
    %v712 = vunpack.c.h.b16 %v191
    %v713 = vunpack.c.l.b16 %v192
    %v714 = vunpack.c.h.b16 %v192
    %v715 = vunpack.c.l.b16 %v193
    %v716 = vunpack.c.h.b16 %v193
    %v717 = vunpack.c.l.b16 %v194
    %v718 = vunpack.c.h.b16 %v194
    %v719 = vunpack.c.l.b16 %v195
    %v720 = vunpack.c.h.b16 %v195
    %v721 = vunpack.c.l.b16 %v196
    %v722 = vunpack.c.h.b16 %v196
    %v723 = vunpack.c.l.b16 %v197
    %v724 = vunpack.c.h.b16 %v197
    %v725 = vunpack.c.l.b16 %v198
    %v726 = vunpack.c.h.b16 %v198
    %v727 = vunpack.c.l.b16 %v199
    %v728 = vunpack.c.h.b16 %v199
    %v729 = vunpack.c.l.b16 %v200
    %v730 = vunpack.c.h.b16 %v200
    %v731 = vunpack.c.l.b16 %v201
    %v732 = vunpack.c.h.b16 %v201
    %v733 = vunpack.c.l.b16 %v202
    %v734 = vunpack.c.h.b16 %v202
    %v735 = vunpack.c.l.b16 %v203
    %v736 = vunpack.c.h.b16 %v203
    %v737 = vunpack.c.l.b16 %v204
    %v738 = vunpack.c.h.b16 %v204
    %v739 = vunpack.c.l.b16 %v205
    %v740 = vunpack.c.h.b16 %v205
    %v741 = vunpack.c.l.b16 %v206
    %v742 = vunpack.c.h.b16 %v206
    %v743 = vunpack.c.l.b16 %v207
    %v744 = vunpack.c.h.b16 %v207
    %v745 = vunpack.c.l.b16 %v208
    %v746 = vunpack.c.h.b16 %v208
    %v747 = vunpack.c.l.b16 %v209
    %v748 = vunpack.c.h.b16 %v209
    %v749 = vunpack.c.l.b16 %v210
    %v750 = vunpack.c.h.b16 %v210
    %v751 = vunpack.c.l.b16 %v211
    %v752 = vunpack.c.h.b16 %v211
    %v753 = vunpack.c.l.b16 %v212
    %v754 = vunpack.c.h.b16 %v212
    %v755 = vunpack.c.l.b16 %v213
    %v756 = vunpack.c.h.b16 %v213
    %v757 = vunpack.c.l.b16 %v214
    %v758 = vunpack.c.h.b16 %v214
    %v759 = vunpack.c.l.b16 %v215
    %v760 = vunpack.c.h.b16 %v215
    %v761 = vunpack.c.l.b16 %v216
    %v762 = vunpack.c.h.b16 %v216
    %v763 = vunpack.c.l.b16 %v217
    %v764 = vunpack.c.h.b16 %v217
    %v765 = vunpack.c.l.b16 %v218
    %v766 = vunpack.c.h.b16 %v218
    %v767 = vunpack.c.l.b16 %v219
    %v768 = vunpack.c.h.b16 %v219
    %v769 = vunpack.c.l.b16 %v220
    %v770 = vunpack.c.h.b16 %v220
    %v771 = vunpack.c.l.b16 %v221
    %v772 = vunpack.c.h.b16 %v221
    %v773 = vunpack.c.l.b16 %v222
    %v774 = vunpack.c.h.b16 %v222
    %v775 = vunpack.c.l.b16 %v223
    %v776 = vunpack.c.h.b16 %v223
    %v777 = vunpack.c.l.b16 %v224
    %v778 = vunpack.c.h.b16 %v224
    %v779 = vunpack.c.l.b16 %v225
    %v780 = vunpack.c.h.b16 %v225
    %v781 = vunpack.c.l.b16 %v226
    %v782 = vunpack.c.h.b16 %v226
    %v783 = vunpack.c.l.b16 %v227
    %v784 = vunpack.c.h.b16 %v227
    %v785 = vunpack.c.l.b16 %v228
    %v786 = vunpack.c.h.b16 %v228
    %v787 = vunpack.c.l.b16 %v229
    %v788 = vunpack.c.h.b16 %v229
    %v789 = vunpack.c.l.b16 %v230
    %v790 = vunpack.c.h.b16 %v230
    %v791 = vunpack.c.l.b16 %v231
    %v792 = vunpack.c.h.b16 %v231
    %v793 = vunpack.c.l.b16 %v232
    %v794 = vunpack.c.h.b16 %v232
    %v795 = vunpack.c.l.b16 %v233
    %v796 = vunpack.c.h.b16 %v233
    %v797 = vunpack.c.l.b16 %v234
    %v798 = vunpack.c.h.b16 %v234
    %v799 = vunpack.c.l.b16 %v235
    %v800 = vunpack.c.h.b16 %v235
    %v801 = vunpack.c.l.b16 %v236
    %v802 = vunpack.c.h.b16 %v236
    %v803 = vunpack.c.l.b16 %v237
    %v804 = vunpack.c.h.b16 %v237
    %v805 = vunpack.c.l.b16 %v238
    %v806 = vunpack.c.h.b16 %v238
    %v807 = vunpack.c.l.b16 %v239
    %v808 = vunpack.c.h.b16 %v239
    %v809 = vunpack.c.l.b16 %v240
    %v810 = vunpack.c.h.b16 %v240
    %v811 = vunpack.c.l.b16 %v241
    %v812 = vunpack.c.h.b16 %v241
    %v813 = vunpack.c.l.b16 %v242
    %v814 = vunpack.c.h.b16 %v242
    %v815 = vunpack.c.l.b16 %v243
    %v816 = vunpack.c.h.b16 %v243
    %v817 = vunpack.c.l.b16 %v244
    %v818 = vunpack.c.h.b16 %v244
    %v819 = vunpack.c.l.b16 %v245
    %v820 = vunpack.c.h.b16 %v245
    %v821 = vunpack.c.l.b16 %v246
    %v822 = vunpack.c.h.b16 %v246
    %v823 = vunpack.c.l.b16 %v247
    %v824 = vunpack.c.h.b16 %v247
    %v825 = vunpack.c.l.b16 %v248
    %v826 = vunpack.c.h.b16 %v248
    %v827 = vunpack.c.l.b16 %v249
    %v828 = vunpack.c.h.b16 %v249
    %v829 = vunpack.c.l.b16 %v250
    %v830 = vunpack.c.h.b16 %v250
    %v831 = vunpack.c.l.b16 %v251
    %v832 = vunpack.c.h.b16 %v251
    %v833 = vunpack.c.l.b16 %v252
    %v834 = vunpack.c.h.b16 %v252
    %v835 = vunpack.c.l.b16 %v253
    %v836 = vunpack.c.h.b16 %v253
    %v837 = vunpack.c.l.b16 %v254
    %v838 = vunpack.c.h.b16 %v254
    %v839 = vunpack.c.l.b16 %v255
    %v840 = vunpack.c.h.b16 %v255
    %v841 = vunpack.c.l.b16 %v256
    %v842 = vunpack.c.h.b16 %v256
    %v843 = vunpack.c.l.b16 %v257
    %v844 = vunpack.c.h.b16 %v257
    %v845 = vunpack.c.l.b16 %v258
    %v846 = vunpack.c.h.b16 %v258
    %v847 = vunpack.c.l.b16 %v259
    %v848 = vunpack.c.h.b16 %v259
    %v849 = vunpack.c.l.b16 %v260
    %v850 = vunpack.c.h.b16 %v260
    %v851 = vunpack.c.l.b16 %v261
    %v852 = vunpack.c.h.b16 %v261
    %v853 = vunpack.c.l.b16 %v262
    %v854 = vunpack.c.h.b16 %v262
    %v855 = vunpack.c.l.b16 %v263
    %v856 = vunpack.c.h.b16 %v263
    %v857 = vunpack.c.l.b16 %v264
    %v858 = vunpack.c.h.b16 %v264
    %v859 = vunpack.c.l.b16 %v265
    %v860 = vunpack.c.h.b16 %v265
    %v861 = vunpack.c.l.b16 %v266
    %v862 = vunpack.c.h.b16 %v266
    %v863 = vunpack.c.l.b16 %v267
    %v864 = vunpack.c.h.b16 %v267
    %v865 = vunpack.c.l.b16 %v268
    %v866 = vunpack.c.h.b16 %v268
    %v867 = vunpack.c.l.b16 %v269
    %v868 = vunpack.c.h.b16 %v269
    %v869 = vunpack.c.l.b16 %v270
    %v870 = vunpack.c.h.b16 %v270
    %v871 = vunpack.c.l.b16 %v271
    %v872 = vunpack.c.h.b16 %v271
    %v873 = vunpack.c.l.b16 %v272
    %v874 = vunpack.c.h.b16 %v272
    %v875 = vunpack.c.l.b16 %v273
    %v876 = vunpack.c.h.b16 %v273
    %v877 = vunpack.c.l.b16 %v274
    %v878 = vunpack.c.h.b16 %v274
    %v879 = vunpack.c.l.b16 %v275
    %v880 = vunpack.c.h.b16 %v275
    %v881 = vunpack.c.l.b16 %v276
    %v882 = vunpack.c.h.b16 %v276
    %v883 = vunpack.c.l.b16 %v277
    %v884 = vunpack.c.h.b16 %v277
    %v885 = vunpack.c.l.b16 %v278
    %v886 = vunpack.c.h.b16 %v278
    %v887 = vunpack.c.l.b16 %v279
    %v888 = vunpack.c.h.b16 %v279
    %v889 = vunpack.c.l.b16 %v280
    %v890 = vunpack.c.h.b16 %v280
    %v891 = vunpack.c.l.b16 %v281
    %v892 = vunpack.c.h.b16 %v281
    %v893 = vunpack.c.l.b16 %v282
    %v894 = vunpack.c.h.b16 %v282
    %v895 = vunpack.c.l.b16 %v283
    %v896 = vunpack.c.h.b16 %v283
    %v897 = vunpack.c.l.b16 %v284
    %v898 = vunpack.c.h.b16 %v284
    %v899 = vunpack.c.l.b16 %v285
    %v900 = vunpack.c.h.b16 %v285
    %v901 = vunpack.c.l.b16 %v286
    %v902 = vunpack.c.h.b16 %v286
    %v903 = vunpack.c.l.b16 %v287
    %v904 = vunpack.c.h.b16 %v287
    %v905 = vunpack.c.l.b16 %v288
    %v906 = vunpack.c.h.b16 %v288
    %v907 = vunpack.c.l.b16 %v289
    %v908 = vunpack.c.h.b16 %v289
    %v909 = vunpack.c.l.b16 %v290
    %v910 = vunpack.c.h.b16 %v290
    %v911 = vunpack.c.l.b16 %v291
    %v912 = vunpack.c.h.b16 %v291
    %v913 = vunpack.c.l.b16 %v292
    %v914 = vunpack.c.h.b16 %v292
    %v915 = vunpack.c.l.b16 %v293
    %v916 = vunpack.c.h.b16 %v293
    %v917 = vunpack.c.l.b16 %v294
    %v918 = vunpack.c.h.b16 %v294
    %v919 = vunpack.c.l.b16 %v295
    %v920 = vunpack.c.h.b16 %v295
    %v921 = vunpack.c.l.b16 %v296
    %v922 = vunpack.c.h.b16 %v296
    %v923 = vunpack.c.l.b16 %v297
    %v924 = vunpack.c.h.b16 %v297
    %v925 = vunpack.c.l.b16 %v298
    %v926 = vunpack.c.h.b16 %v298
    %v927 = vunpack.c.l.b16 %v299
    %v928 = vunpack.c.h.b16 %v299
    %v929 = vunpack.c.l.b16 %v300
    %v930 = vunpack.c.h.b16 %v300
    %v931 = vunpack.c.l.b16 %v301
    %v932 = vunpack.c.h.b16 %v301
    %v933 = vunpack.c.l.b16 %v302
    %v934 = vunpack.c.h.b16 %v302
    %v935 = vunpack.c.l.b16 %v303
    %v936 = vunpack.c.h.b16 %v303
    %v937 = vunpack.c.l.b16 %v304
    %v938 = vunpack.c.h.b16 %v304
    %v939 = vunpack.c.l.b16 %v305
    %v940 = vunpack.c.h.b16 %v305
    %v941 = vunpack.c.l.b16 %v306
    %v942 = vunpack.c.h.b16 %v306
    %v943 = vunpack.c.l.b16 %v307
    %v944 = vunpack.c.h.b16 %v307
    %v945 = vunpack.c.l.b16 %v308
    %v946 = vunpack.c.h.b16 %v308
    %v947 = vunpack.c.l.b16 %v309
    %v948 = vunpack.c.h.b16 %v309
    %v949 = vunpack.c.l.b16 %v310
    %v950 = vunpack.c.h.b16 %v310
    %v951 = vunpack.c.l.b16 %v311
    %v952 = vunpack.c.h.b16 %v311
    %v953 = vunpack.c.l.b16 %v312
    %v954 = vunpack.c.h.b16 %v312
    %v955 = vunpack.c.l.b16 %v313
    %v956 = vunpack.c.h.b16 %v313
    %v957 = vunpack.c.l.b16 %v314
    %v958 = vunpack.c.h.b16 %v314
    %v959 = vunpack.c.l.b16 %v315
    %v960 = vunpack.c.h.b16 %v315
    %v961 = vunpack.c.l.b16 %v316
    %v962 = vunpack.c.h.b16 %v316
    %v963 = vunpack.c.l.b16 %v317
    %v964 = vunpack.c.h.b16 %v317
    %v965 = vunpack.c.l.b16 %v318
    %v966 = vunpack.c.h.b16 %v318
    %v967 = vunpack.c.l.b16 %v319
    %v968 = vunpack.c.h.b16 %v319
    %v969 = vunpack.c.l.b16 %v320
    %v970 = vunpack.c.h.b16 %v320
    %v971 = vunpack.c.l.b16 %v321
    %v972 = vunpack.c.h.b16 %v321
    %v973 = vunpack.c.l.b16 %v322
    %v974 = vunpack.c.h.b16 %v322
    %v975 = vunpack.c.l.b16 %v323
    %v976 = vunpack.c.h.b16 %v323
    %v977 = vunpack.c.l.b16 %v324
    %v978 = vunpack.c.h.b16 %v324
    %v979 = vunpack.c.l.b16 %v325
    %v980 = vunpack.c.h.b16 %v325
    %v981 = vunpack.c.l.b16 %v326
    %v982 = vunpack.c.h.b16 %v326
    %v983 = vunpack.c.l.b16 %v327
    %v984 = vunpack.c.h.b16 %v327
    %v985 = vunpack.c.l.b16 %v328
    %v986 = vunpack.c.h.b16 %v328
    %v987 = vunpack.c.l.b16 %v329
    %v988 = vunpack.c.h.b16 %v329
    %v989 = vunpack.c.l.b16 %v330
    %v990 = vunpack.c.h.b16 %v330
    %v991 = vunpack.c.l.b16 %v331
    %v992 = vunpack.c.h.b16 %v331
    %v993 = vunpack.c.l.b16 %v332
    %v994 = vunpack.c.h.b16 %v332
    %v995 = vunpack.c.l.b16 %v333
    %v996 = vunpack.c.h.b16 %v333
    %v997 = vunpack.c.l.b16 %v334
    %v998 = vunpack.c.h.b16 %v334
    %v999 = vunpack.c.l.b16 %v335
    %v1000 = vunpack.c.h.b16 %v335
    %v1001 = vunpack.c.l.b16 %v336
    %v1002 = vunpack.c.h.b16 %v336
    %v1003 = vunpack.c.l.b16 %v337
    %v1004 = vunpack.c.h.b16 %v337
    %v1005 = vunpack.c.l.b16 %v338
    %v1006 = vunpack.c.h.b16 %v338
    %v1007 = vunpack.c.l.b16 %v339
    %v1008 = vunpack.c.h.b16 %v339
    %v1009 = vunpack.c.l.b16 %v340
    %v1010 = vunpack.c.h.b16 %v340
    %v1011 = vunpack.c.l.b16 %v341
    %v1012 = vunpack.c.h.b16 %v341
    %v1013 = vunpack.c.l.b16 %v342
    %v1014 = vunpack.c.h.b16 %v342
    %v1015 = vunpack.c.l.b16 %v343
    %v1016 = vunpack.c.h.b16 %v343
    %v1017 = vunpack.c.l.b16 %v344
    %v1018 = vunpack.c.h.b16 %v344
    %v1019 = vunpack.c.l.b16 %v345
    %v1020 = vunpack.c.h.b16 %v345
    %v1021 = vunpack.c.l.b16 %v346
    %v1022 = vunpack.c.h.b16 %v346
    %v1023 = vunpack.c.l.b16 %v347
    %v1024 = vunpack.c.h.b16 %v347
    %v1025 = vunpack.c.l.b16 %v348
    %v1026 = vunpack.c.h.b16 %v348
    %v1027 = vunpack.c.l.b16 %v349
    %v1028 = vunpack.c.h.b16 %v349
    %v1029 = vunpack.c.l.b16 %v350
    %v1030 = vunpack.c.h.b16 %v350
    %v1031 = vunpack.c.l.b16 %v351
    %v1032 = vunpack.c.h.b16 %v351
    %v1033 = vunpack.c.l.b16 %v352
    %v1034 = vunpack.c.h.b16 %v352
    %v1035 = vunpack.c.l.b16 %v353
    %v1036 = vunpack.c.h.b16 %v353
    %v1037 = vunpack.c.l.b16 %v354
    %v1038 = vunpack.c.h.b16 %v354
    %v1039 = vunpack.c.l.b16 %v355
    %v1040 = vunpack.c.h.b16 %v355
    %v1041 = vunpack.c.l.b16 %v356
    %v1042 = vunpack.c.h.b16 %v356
    %v1043 = vunpack.c.l.b16 %v357
    %v1044 = vunpack.c.h.b16 %v357
    %v1045 = vunpack.c.l.b16 %v358
    %v1046 = vunpack.c.h.b16 %v358
    %v1047 = vunpack.c.l.b16 %v359
    %v1048 = vunpack.c.h.b16 %v359
    %v1049 = vunpack.c.l.b16 %v360
    %v1050 = vunpack.c.h.b16 %v360
    %v1051 = vunpack.c.l.b16 %v361
    %v1052 = vunpack.c.h.b16 %v361
    %v1053 = vunpack.c.l.b16 %v362
    %v1054 = vunpack.c.h.b16 %v362
    %v1055 = vunpack.c.l.b16 %v363
    %v1056 = vunpack.c.h.b16 %v363
    %v1057 = vunpack.c.l.b16 %v364
    %v1058 = vunpack.c.h.b16 %v364
    %v1059 = vunpack.c.l.b16 %v365
    %v1060 = vunpack.c.h.b16 %v365
    %v1061 = vunpack.c.l.b16 %v366
    %v1062 = vunpack.c.h.b16 %v366
    %v1063 = vunpack.c.l.b16 %v367
    %v1064 = vunpack.c.h.b16 %v367
    %v1065 = vunpack.c.l.b16 %v368
    %v1066 = vunpack.c.h.b16 %v368
    %v1067 = vunpack.c.l.b16 %v369
    %v1068 = vunpack.c.h.b16 %v369
    %v1069 = vunpack.c.l.b16 %v370
    %v1070 = vunpack.c.h.b16 %v370
    %v1071 = vunpack.c.l.b16 %v371
    %v1072 = vunpack.c.h.b16 %v371
    %v1073 = vunpack.c.l.b16 %v372
    %v1074 = vunpack.c.h.b16 %v372
    %v1075 = vunpack.c.l.b16 %v373
    %v1076 = vunpack.c.h.b16 %v373
    %v1077 = vunpack.c.l.b16 %v374
    %v1078 = vunpack.c.h.b16 %v374
    %v1079 = vunpack.c.l.b16 %v375
    %v1080 = vunpack.c.h.b16 %v375
    %v1081 = vunpack.c.l.b16 %v376
    %v1082 = vunpack.c.h.b16 %v376
    %v1083 = vunpack.c.l.b16 %v377
    %v1084 = vunpack.c.h.b16 %v377
    %v1085 = vunpack.c.l.b16 %v378
    %v1086 = vunpack.c.h.b16 %v378
    %v1087 = vunpack.c.l.b16 %v379
    %v1088 = vunpack.c.h.b16 %v379
    %v1089 = vunpack.c.l.b16 %v380
    %v1090 = vunpack.c.h.b16 %v380
    %v1091 = vunpack.c.l.b16 %v381
    %v1092 = vunpack.c.h.b16 %v381
    %v1093 = vunpack.c.l.b16 %v382
    %v1094 = vunpack.c.h.b16 %v382
    %v1095 = vunpack.c.l.b16 %v383
    %v1096 = vunpack.c.h.b16 %v383
    %v1097 = vunpack.c.l.b16 %v384
    %v1098 = vunpack.c.h.b16 %v384
    %v1099 = vunpack.c.l.b16 %v385
    %v1100 = vunpack.c.h.b16 %v385
    %v1101 = vunpack.c.l.b16 %v386
    %v1102 = vunpack.c.h.b16 %v386
    %v1103 = vunpack.c.l.b16 %v387
    %v1104 = vunpack.c.h.b16 %v387
    %v1105 = vunpack.c.l.b16 %v388
    %v1106 = vunpack.c.h.b16 %v388
    %v1107 = vunpack.c.l.b16 %v389
    %v1108 = vunpack.c.h.b16 %v389
    %v1109 = vunpack.c.l.b16 %v390
    %v1110 = vunpack.c.h.b16 %v390
    %v1111 = vunpack.c.l.b16 %v391
    %v1112 = vunpack.c.h.b16 %v391
    %v1113 = vunpack.c.l.b16 %v392
    %v1114 = vunpack.c.h.b16 %v392
    %v1115 = vunpack.c.l.b16 %v393
    %v1116 = vunpack.c.h.b16 %v393
    %v1117 = vunpack.c.l.b16 %v394
    %v1118 = vunpack.c.h.b16 %v394
    %v1119 = vunpack.c.l.b16 %v395
    %v1120 = vunpack.c.h.b16 %v395
    %v1121 = vunpack.c.l.b16 %v396
    %v1122 = vunpack.c.h.b16 %v396
    %v1123 = vunpack.c.l.b16 %v397
    %v1124 = vunpack.c.h.b16 %v397
    %v1125 = vunpack.c.l.b16 %v398
    %v1126 = vunpack.c.h.b16 %v398
    %v1127 = vunpack.c.l.b16 %v399
    %v1128 = vunpack.c.h.b16 %v399
    %v1129 = vunpack.c.l.b16 %v400
    %v1130 = vunpack.c.h.b16 %v400
    %v1131 = vpack.c.b16 %v687, %v683
    %v1132 = vpack.c.b16 %v688, %v684
    %v1133 = vpack.c.b16 %v689, %v685
    %v1134 = vpack.c.b16 %v690, %v686
    %v1135 = vpack.c.b16 %v695, %v691
    %v1136 = vpack.c.b16 %v696, %v692
    %v1137 = vpack.c.b16 %v697, %v693
    %v1138 = vpack.c.b16 %v698, %v694
    %v1139 = vpack.c.b16 %v703, %v699
    %v1140 = vpack.c.b16 %v704, %v700
    %v1141 = vpack.c.b16 %v705, %v701
    %v1142 = vpack.c.b16 %v706, %v702
    %v1143 = vpack.c.b16 %v711, %v707
    %v1144 = vpack.c.b16 %v712, %v708
    %v1145 = vpack.c.b16 %v713, %v709
    %v1146 = vpack.c.b16 %v714, %v710
    %v1147 = vpack.c.b16 %v719, %v715
    %v1148 = vpack.c.b16 %v720, %v716
    %v1149 = vpack.c.b16 %v721, %v717
    %v1150 = vpack.c.b16 %v722, %v718
    %v1151 = vpack.c.b16 %v727, %v723
    %v1152 = vpack.c.b16 %v728, %v724
    %v1153 = vpack.c.b16 %v729, %v725
    %v1154 = vpack.c.b16 %v730, %v726
    %v1155 = vpack.c.b16 %v735, %v731
    %v1156 = vpack.c.b16 %v736, %v732
    %v1157 = vpack.c.b16 %v737, %v733
    %v1158 = vpack.c.b16 %v738, %v734
    %v1159 = vpack.c.b16 %v743, %v739
    %v1160 = vpack.c.b16 %v744, %v740
    %v1161 = vpack.c.b16 %v745, %v741
    %v1162 = vpack.c.b16 %v746, %v742
    %v1163 = vpack.c.b16 %v751, %v747
    %v1164 = vpack.c.b16 %v752, %v748
    %v1165 = vpack.c.b16 %v753, %v749
    %v1166 = vpack.c.b16 %v754, %v750
    %v1167 = vpack.c.b16 %v759, %v755
    %v1168 = vpack.c.b16 %v760, %v756
    %v1169 = vpack.c.b16 %v761, %v757
    %v1170 = vpack.c.b16 %v762, %v758
    %v1171 = vpack.c.b16 %v767, %v763
    %v1172 = vpack.c.b16 %v768, %v764
    %v1173 = vpack.c.b16 %v769, %v765
    %v1174 = vpack.c.b16 %v770, %v766
    %v1175 = vpack.c.b16 %v775, %v771
    %v1176 = vpack.c.b16 %v776, %v772
    %v1177 = vpack.c.b16 %v777, %v773
    %v1178 = vpack.c.b16 %v778, %v774
    %v1179 = vpack.c.b16 %v783, %v779
    %v1180 = vpack.c.b16 %v784, %v780
    %v1181 = vpack.c.b16 %v785, %v781
    %v1182 = vpack.c.b16 %v786, %v782
    %v1183 = vpack.c.b16 %v791, %v787
    %v1184 = vpack.c.b16 %v792, %v788
    %v1185 = vpack.c.b16 %v793, %v789
    %v1186 = vpack.c.b16 %v794, %v790
    %v1187 = vpack.c.b16 %v799, %v795
    %v1188 = vpack.c.b16 %v800, %v796
    %v1189 = vpack.c.b16 %v801, %v797
    %v1190 = vpack.c.b16 %v802, %v798
    %v1191 = vpack.c.b16 %v807, %v803
    %v1192 = vpack.c.b16 %v808, %v804
    %v1193 = vpack.c.b16 %v809, %v805
    %v1194 = vpack.c.b16 %v810, %v806
    %v1195 = vpack.c.b16 %v815, %v811
    %v1196 = vpack.c.b16 %v816, %v812
    %v1197 = vpack.c.b16 %v817, %v813
    %v1198 = vpack.c.b16 %v818, %v814
    %v1199 = vpack.c.b16 %v823, %v819
    %v1200 = vpack.c.b16 %v824, %v820
    %v1201 = vpack.c.b16 %v825, %v821
    %v1202 = vpack.c.b16 %v826, %v822
    %v1203 = vpack.c.b16 %v831, %v827
    %v1204 = vpack.c.b16 %v832, %v828
    %v1205 = vpack.c.b16 %v833, %v829
    %v1206 = vpack.c.b16 %v834, %v830
    %v1207 = vpack.c.b16 %v839, %v835
    %v1208 = vpack.c.b16 %v840, %v836
    %v1209 = vpack.c.b16 %v841, %v837
    %v1210 = vpack.c.b16 %v842, %v838
    %v1211 = vpack.c.b16 %v847, %v843
    %v1212 = vpack.c.b16 %v848, %v844
    %v1213 = vpack.c.b16 %v849, %v845
    %v1214 = vpack.c.b16 %v850, %v846
    %v1215 = vpack.c.b16 %v855, %v851
    %v1216 = vpack.c.b16 %v856, %v852
    %v1217 = vpack.c.b16 %v857, %v853
    %v1218 = vpack.c.b16 %v858, %v854
    %v1219 = vpack.c.b16 %v863, %v859
    %v1220 = vpack.c.b16 %v864, %v860
    %v1221 = vpack.c.b16 %v865, %v861
    %v1222 = vpack.c.b16 %v866, %v862
    %v1223 = vpack.c.b16 %v871, %v867
    %v1224 = vpack.c.b16 %v872, %v868
    %v1225 = vpack.c.b16 %v873, %v869
    %v1226 = vpack.c.b16 %v874, %v870
    %v1227 = vpack.c.b16 %v879, %v875
    %v1228 = vpack.c.b16 %v880, %v876
    %v1229 = vpack.c.b16 %v881, %v877
    %v1230 = vpack.c.b16 %v882, %v878
    %v1231 = vpack.c.b16 %v887, %v883
    %v1232 = vpack.c.b16 %v888, %v884
    %v1233 = vpack.c.b16 %v889, %v885
    %v1234 = vpack.c.b16 %v890, %v886
    %v1235 = vpack.c.b16 %v895, %v891
    %v1236 = vpack.c.b16 %v896, %v892
    %v1237 = vpack.c.b16 %v897, %v893
    %v1238 = vpack.c.b16 %v898, %v894
    %v1239 = vpack.c.b16 %v903, %v899
    %v1240 = vpack.c.b16 %v904, %v900
    %v1241 = vpack.c.b16 %v905, %v901
    %v1242 = vpack.c.b16 %v906, %v902
    %v1243 = vpack.c.b16 %v911, %v907
    %v1244 = vpack.c.b16 %v912, %v908
    %v1245 = vpack.c.b16 %v913, %v909
    %v1246 = vpack.c.b16 %v914, %v910
    %v1247 = vpack.c.b16 %v919, %v915
    %v1248 = vpack.c.b16 %v920, %v916
    %v1249 = vpack.c.b16 %v921, %v917
    %v1250 = vpack.c.b16 %v922, %v918
    %v1251 = vpack.c.b16 %v927, %v923
    %v1252 = vpack.c.b16 %v928, %v924
    %v1253 = vpack.c.b16 %v929, %v925
    %v1254 = vpack.c.b16 %v930, %v926
    %v1255 = vpack.c.b16 %v935, %v931
    %v1256 = vpack.c.b16 %v936, %v932
    %v1257 = vpack.c.b16 %v937, %v933
    %v1258 = vpack.c.b16 %v938, %v934
    %v1259 = vpack.c.b16 %v943, %v939
    %v1260 = vpack.c.b16 %v944, %v940
    %v1261 = vpack.c.b16 %v945, %v941
    %v1262 = vpack.c.b16 %v946, %v942
    %v1263 = vpack.c.b16 %v951, %v947
    %v1264 = vpack.c.b16 %v952, %v948
    %v1265 = vpack.c.b16 %v953, %v949
    %v1266 = vpack.c.b16 %v954, %v950
    %v1267 = vpack.c.b16 %v959, %v955
    %v1268 = vpack.c.b16 %v960, %v956
    %v1269 = vpack.c.b16 %v961, %v957
    %v1270 = vpack.c.b16 %v962, %v958
    %v1271 = vpack.c.b16 %v967, %v963
    %v1272 = vpack.c.b16 %v968, %v964
    %v1273 = vpack.c.b16 %v969, %v965
    %v1274 = vpack.c.b16 %v970, %v966
    %v1275 = vpack.c.b16 %v975, %v971
    %v1276 = vpack.c.b16 %v976, %v972
    %v1277 = vpack.c.b16 %v977, %v973
    %v1278 = vpack.c.b16 %v978, %v974
    %v1279 = vpack.c.b16 %v983, %v979
    %v1280 = vpack.c.b16 %v984, %v980
    %v1281 = vpack.c.b16 %v985, %v981
    %v1282 = vpack.c.b16 %v986, %v982
    %v1283 = vpack.c.b16 %v991, %v987
    %v1284 = vpack.c.b16 %v992, %v988
    %v1285 = vpack.c.b16 %v993, %v989
    %v1286 = vpack.c.b16 %v994, %v990
    %v1287 = vpack.c.b16 %v999, %v995
    %v1288 = vpack.c.b16 %v1000, %v996
    %v1289 = vpack.c.b16 %v1001, %v997
    %v1290 = vpack.c.b16 %v1002, %v998
    %v1291 = vpack.c.b16 %v1007, %v1003
    %v1292 = vpack.c.b16 %v1008, %v1004
    %v1293 = vpack.c.b16 %v1009, %v1005
    %v1294 = vpack.c.b16 %v1010, %v1006
    %v1295 = vpack.c.b16 %v1015, %v1011
    %v1296 = vpack.c.b16 %v1016, %v1012
    %v1297 = vpack.c.b16 %v1017, %v1013
    %v1298 = vpack.c.b16 %v1018, %v1014
    %v1299 = vpack.c.b16 %v1023, %v1019
    %v1300 = vpack.c.b16 %v1024, %v1020
    %v1301 = vpack.c.b16 %v1025, %v1021
    %v1302 = vpack.c.b16 %v1026, %v1022
    %v1303 = vpack.c.b16 %v1031, %v1027
    %v1304 = vpack.c.b16 %v1032, %v1028
    %v1305 = vpack.c.b16 %v1033, %v1029
    %v1306 = vpack.c.b16 %v1034, %v1030
    %v1307 = vpack.c.b16 %v1039, %v1035
    %v1308 = vpack.c.b16 %v1040, %v1036
    %v1309 = vpack.c.b16 %v1041, %v1037
    %v1310 = vpack.c.b16 %v1042, %v1038
    %v1311 = vpack.c.b16 %v1047, %v1043
    %v1312 = vpack.c.b16 %v1048, %v1044
    %v1313 = vpack.c.b16 %v1049, %v1045
    %v1314 = vpack.c.b16 %v1050, %v1046
    %v1315 = vpack.c.b16 %v1055, %v1051
    %v1316 = vpack.c.b16 %v1056, %v1052
    %v1317 = vpack.c.b16 %v1057, %v1053
    %v1318 = vpack.c.b16 %v1058, %v1054
    %v1319 = vpack.c.b16 %v1063, %v1059
    %v1320 = vpack.c.b16 %v1064, %v1060
    %v1321 = vpack.c.b16 %v1065, %v1061
    %v1322 = vpack.c.b16 %v1066, %v1062
    %v1323 = vpack.c.b16 %v1071, %v1067
    %v1324 = vpack.c.b16 %v1072, %v1068
    %v1325 = vpack.c.b16 %v1073, %v1069
    %v1326 = vpack.c.b16 %v1074, %v1070
    %v1327 = vpack.c.b16 %v1079, %v1075
    %v1328 = vpack.c.b16 %v1080, %v1076
    %v1329 = vpack.c.b16 %v1081, %v1077
    %v1330 = vpack.c.b16 %v1082, %v1078
    %v1331 = vpack.c.b16 %v1087, %v1083
    %v1332 = vpack.c.b16 %v1088, %v1084
    %v1333 = vpack.c.b16 %v1089, %v1085
    %v1334 = vpack.c.b16 %v1090, %v1086
    %v1335 = vpack.c.b16 %v1095, %v1091
    %v1336 = vpack.c.b16 %v1096, %v1092
    %v1337 = vpack.c.b16 %v1097, %v1093
    %v1338 = vpack.c.b16 %v1098, %v1094
    %v1339 = vpack.c.b16 %v1103, %v1099
    %v1340 = vpack.c.b16 %v1104, %v1100
    %v1341 = vpack.c.b16 %v1105, %v1101
    %v1342 = vpack.c.b16 %v1106, %v1102
    %v1343 = vpack.c.b16 %v1111, %v1107
    %v1344 = vpack.c.b16 %v1112, %v1108
    %v1345 = vpack.c.b16 %v1113, %v1109
    %v1346 = vpack.c.b16 %v1114, %v1110
    %v1347 = vpack.c.b16 %v1119, %v1115
    %v1348 = vpack.c.b16 %v1120, %v1116
    %v1349 = vpack.c.b16 %v1121, %v1117
    %v1350 = vpack.c.b16 %v1122, %v1118
    %v1351 = vpack.c.b16 %v1127, %v1123
    %v1352 = vpack.c.b16 %v1128, %v1124
    %v1353 = vpack.c.b16 %v1129, %v1125
    %v1354 = vpack.c.b16 %v1130, %v1126
    %1579 = vmatprep.subr.bf16.mxu0 %v1160
    %1580 = vmatpush1.bf16.msra.mxu0 %v1159
    %1581 = vmatprep.subr.bf16.mxu0 %v1156
    %1582 = vmatpush1.bf16.msra.mxu0 %v1155
    %1583 = vmatprep.subr.bf16.mxu0 %v1152
    %1584 = vmatpush1.bf16.msra.mxu0 %v1151
    %1585 = vmatprep.subr.bf16.mxu0 %v1148
    %1586 = vmatpush1.bf16.msra.mxu0 %v1147
    %1587 = vmatprep.subr.bf16.mxu0 %v1144
    %1588 = vmatpush1.bf16.msra.mxu0 %v1143
    %1589 = vmatprep.subr.bf16.mxu0 %v1140
    %1590 = vmatpush1.bf16.msra.mxu0 %v1139
    %1591 = vmatprep.subr.bf16.mxu0 %v1136
    %1592 = vmatpush1.bf16.msra.mxu0 %v1135
    %1593 = vmatprep.subr.bf16.mxu0 %v1132
    %1594 = vmatpush1.bf16.msra.mxu0 %v1131
    %1595 = vmatprep.subr.bf16.mxu0 %v1192
    %1596 = vmatpush2.bf16.msra.mxu0 %v1191
    %1597 = vmatprep.subr.bf16.mxu0 %v1188
    %1598 = vmatpush2.bf16.msra.mxu0 %v1187
    %1599 = vmatprep.subr.bf16.mxu0 %v1184
    %1600 = vmatpush2.bf16.msra.mxu0 %v1183
    %1601 = vmatprep.subr.bf16.mxu0 %v1180
    %1602 = vmatpush2.bf16.msra.mxu0 %v1179
    %1603 = vmatprep.subr.bf16.mxu0 %v1176
    %1604 = vmatpush2.bf16.msra.mxu0 %v1175
    %1605 = vmatprep.subr.bf16.mxu0 %v1172
    %1606 = vmatpush2.bf16.msra.mxu0 %v1171
    %1607 = vmatprep.subr.bf16.mxu0 %v1168
    %1608 = vmatpush2.bf16.msra.mxu0 %v1167
    %1609 = vmatprep.subr.bf16.mxu0 %v1164
    %1610 = vmatpush2.bf16.msra.mxu0 %v1163
    %1611 = vmatprep.mubr.bf16.mxu0 %v446
    %1612 = vmatmul.mubr.bf16.gmra.mxu0 %v445
    %v1613 = vpop.f32.mrf.mxu0
    %v1614 = vadd.f32 %v406, %v1613
    %v1615 = vpop.f32.mrf.mxu0
    %v1616 = vadd.f32 %v410, %v1615
    %v1617 = vpop.f32.mrf.mxu0
    %v1618 = vadd.f32 %v406, %v1617
    %v1619 = vpop.f32.mrf.mxu0
    %v1620 = vadd.f32 %v410, %v1619
    %1621 = vdwg.mxu0
    %1622 = vmatprep.subr.bf16.mxu0 %v1224
    %1623 = vmatpush1.bf16.msra.mxu0 %v1223
    %1624 = vmatprep.subr.bf16.mxu0 %v1220
    %1625 = vmatpush1.bf16.msra.mxu0 %v1219
    %1626 = vmatprep.subr.bf16.mxu0 %v1216
    %1627 = vmatpush1.bf16.msra.mxu0 %v1215
    %1628 = vmatprep.subr.bf16.mxu0 %v1212
    %1629 = vmatpush1.bf16.msra.mxu0 %v1211
    %1630 = vmatprep.subr.bf16.mxu0 %v1208
    %1631 = vmatpush1.bf16.msra.mxu0 %v1207
    %1632 = vmatprep.subr.bf16.mxu0 %v1204
    %1633 = vmatpush1.bf16.msra.mxu0 %v1203
    %1634 = vmatprep.subr.bf16.mxu0 %v1200
    %1635 = vmatpush1.bf16.msra.mxu0 %v1199
    %1636 = vmatprep.subr.bf16.mxu0 %v1196
    %1637 = vmatpush1.bf16.msra.mxu0 %v1195
    %1638 = vmatprep.subr.bf16.mxu0 %v1256
    %1639 = vmatpush2.bf16.msra.mxu0 %v1255
    %1640 = vmatprep.subr.bf16.mxu0 %v1252
    %1641 = vmatpush2.bf16.msra.mxu0 %v1251
    %1642 = vmatprep.subr.bf16.mxu0 %v1248
    %1643 = vmatpush2.bf16.msra.mxu0 %v1247
    %1644 = vmatprep.subr.bf16.mxu0 %v1244
    %1645 = vmatpush2.bf16.msra.mxu0 %v1243
    %1646 = vmatprep.subr.bf16.mxu0 %v1240
    %1647 = vmatpush2.bf16.msra.mxu0 %v1239
    %1648 = vmatprep.subr.bf16.mxu0 %v1236
    %1649 = vmatpush2.bf16.msra.mxu0 %v1235
    %1650 = vmatprep.subr.bf16.mxu0 %v1232
    %1651 = vmatpush2.bf16.msra.mxu0 %v1231
    %1652 = vmatprep.subr.bf16.mxu0 %v1228
    %1653 = vmatpush2.bf16.msra.mxu0 %v1227
    %1654 = vmatprep.mubr.bf16.mxu0 %v448
    %1655 = vmatmul.mubr.bf16.gmra.mxu0 %v447
    %v1656 = vpop.f32.mrf.mxu0
    %v1657 = vadd.f32 %v1614, %v1656
    %v1658 = vpop.f32.mrf.mxu0
    %v1659 = vadd.f32 %v1616, %v1658
    %v1660 = vpop.f32.mrf.mxu0
    %v1661 = vadd.f32 %v1618, %v1660
    %v1662 = vpop.f32.mrf.mxu0
    %v1663 = vadd.f32 %v1620, %v1662
    %1664 = vdwg.mxu0
    %1665 = vmatprep.subr.bf16.mxu0 %v1288
    %1666 = vmatpush1.bf16.msra.mxu0 %v1287
    %1667 = vmatprep.subr.bf16.mxu0 %v1284
    %1668 = vmatpush1.bf16.msra.mxu0 %v1283
    %1669 = vmatprep.subr.bf16.mxu0 %v1280
    %1670 = vmatpush1.bf16.msra.mxu0 %v1279
    %1671 = vmatprep.subr.bf16.mxu0 %v1276
    %1672 = vmatpush1.bf16.msra.mxu0 %v1275
    %1673 = vmatprep.subr.bf16.mxu0 %v1272
    %1674 = vmatpush1.bf16.msra.mxu0 %v1271
    %1675 = vmatprep.subr.bf16.mxu0 %v1268
    %1676 = vmatpush1.bf16.msra.mxu0 %v1267
    %1677 = vmatprep.subr.bf16.mxu0 %v1264
    %1678 = vmatpush1.bf16.msra.mxu0 %v1263
    %1679 = vmatprep.subr.bf16.mxu0 %v1260
    %1680 = vmatpush1.bf16.msra.mxu0 %v1259
    %1681 = vmatprep.subr.bf16.mxu0 %v1320
    %1682 = vmatpush2.bf16.msra.mxu0 %v1319
    %1683 = vmatprep.subr.bf16.mxu0 %v1316
    %1684 = vmatpush2.bf16.msra.mxu0 %v1315
    %1685 = vmatprep.subr.bf16.mxu0 %v1312
    %1686 = vmatpush2.bf16.msra.mxu0 %v1311
    %1687 = vmatprep.subr.bf16.mxu0 %v1308
    %1688 = vmatpush2.bf16.msra.mxu0 %v1307
    %1689 = vmatprep.subr.bf16.mxu0 %v1304
    %1690 = vmatpush2.bf16.msra.mxu0 %v1303
    %1691 = vmatprep.subr.bf16.mxu0 %v1300
    %1692 = vmatpush2.bf16.msra.mxu0 %v1299
    %1693 = vmatprep.subr.bf16.mxu0 %v1296
    %1694 = vmatpush2.bf16.msra.mxu0 %v1295
    %1695 = vmatprep.subr.bf16.mxu0 %v1292
    %1696 = vmatpush2.bf16.msra.mxu0 %v1291
    %1697 = vmatprep.mubr.bf16.mxu0 %v450
    %1698 = vmatmul.mubr.bf16.gmra.mxu0 %v449
    %v1699 = vpop.f32.mrf.mxu0
    %v1700 = vadd.f32 %v1657, %v1699
    %v1701 = vpop.f32.mrf.mxu0
    %v1702 = vadd.f32 %v1659, %v1701
    %v1703 = vpop.f32.mrf.mxu0
    %v1704 = vadd.f32 %v1661, %v1703
    %v1705 = vpop.f32.mrf.mxu0
    %v1706 = vadd.f32 %v1663, %v1705
    %1707 = vdwg.mxu0
    %1708 = vmatprep.subr.bf16.mxu0 %v1352
    %1709 = vmatpush1.bf16.msra.mxu0 %v1351
    %1710 = vmatprep.subr.bf16.mxu0 %v1348
    %1711 = vmatpush1.bf16.msra.mxu0 %v1347
    %1712 = vmatprep.subr.bf16.mxu0 %v1344
    %1713 = vmatpush1.bf16.msra.mxu0 %v1343
    %1714 = vmatprep.subr.bf16.mxu0 %v1340
    %1715 = vmatpush1.bf16.msra.mxu0 %v1339
    %1716 = vmatprep.subr.bf16.mxu0 %v1336
    %1717 = vmatpush1.bf16.msra.mxu0 %v1335
    %1718 = vmatprep.subr.bf16.mxu0 %v1332
    %1719 = vmatpush1.bf16.msra.mxu0 %v1331
    %1720 = vmatprep.subr.bf16.mxu0 %v1328
    %1721 = vmatpush1.bf16.msra.mxu0 %v1327
    %1722 = vmatprep.subr.bf16.mxu0 %v1324
    %1723 = vmatpush1.bf16.msra.mxu0 %v1323
    %1724 = vmatprep.subr.bf16.mxu0 0
    %1725 = vmatpush2.bf16.msra.mxu0 0
    %1726 = vmatprep.subr.bf16.mxu0 0
    %1727 = vmatpush2.bf16.msra.mxu0 0
    %1728 = vmatprep.subr.bf16.mxu0 0
    %1729 = vmatpush2.bf16.msra.mxu0 0
    %1730 = vmatprep.subr.bf16.mxu0 0
    %1731 = vmatpush2.bf16.msra.mxu0 0
    %1732 = vmatprep.subr.bf16.mxu0 0
    %1733 = vmatpush2.bf16.msra.mxu0 0
    %1734 = vmatprep.subr.bf16.mxu0 0
    %1735 = vmatpush2.bf16.msra.mxu0 0
    %1736 = vmatprep.subr.bf16.mxu0 0
    %1737 = vmatpush2.bf16.msra.mxu0 0
    %1738 = vmatprep.subr.bf16.mxu0 0
    %1739 = vmatpush2.bf16.msra.mxu0 0
    %1740 = vmatprep.mubr.bf16.mxu0 0
    %1741 = vmatmul.mubr.bf16.gmra.mxu0 %v451
    %v1742 = vpop.f32.mrf.mxu0
    %v1743 = vadd.f32 %v1700, %v1742
    %v1744 = vpop.f32.mrf.mxu0
    %v1745 = vadd.f32 %v1702, %v1744
    %v1746 = vpop.f32.mrf.mxu0
    %v1747 = vadd.f32 %v1704, %v1746
    %v1748 = vpop.f32.mrf.mxu0
    %v1749 = vadd.f32 %v1706, %v1748
    %1750 = vdwg.mxu0
    %1751 = vmatprep.subr.bf16.mxu0 %v1162
    %1752 = vmatpush1.bf16.msra.mxu0 %v1161
    %1753 = vmatprep.subr.bf16.mxu0 %v1158
    %1754 = vmatpush1.bf16.msra.mxu0 %v1157
    %1755 = vmatprep.subr.bf16.mxu0 %v1154
    %1756 = vmatpush1.bf16.msra.mxu0 %v1153
    %1757 = vmatprep.subr.bf16.mxu0 %v1150
    %1758 = vmatpush1.bf16.msra.mxu0 %v1149
    %1759 = vmatprep.subr.bf16.mxu0 %v1146
    %1760 = vmatpush1.bf16.msra.mxu0 %v1145
    %1761 = vmatprep.subr.bf16.mxu0 %v1142
    %1762 = vmatpush1.bf16.msra.mxu0 %v1141
    %1763 = vmatprep.subr.bf16.mxu0 %v1138
    %1764 = vmatpush1.bf16.msra.mxu0 %v1137
    %1765 = vmatprep.subr.bf16.mxu0 %v1134
    %1766 = vmatpush1.bf16.msra.mxu0 %v1133
    %1767 = vmatprep.subr.bf16.mxu0 %v1194
    %1768 = vmatpush2.bf16.msra.mxu0 %v1193
    %1769 = vmatprep.subr.bf16.mxu0 %v1190
    %1770 = vmatpush2.bf16.msra.mxu0 %v1189
    %1771 = vmatprep.subr.bf16.mxu0 %v1186
    %1772 = vmatpush2.bf16.msra.mxu0 %v1185
    %1773 = vmatprep.subr.bf16.mxu0 %v1182
    %1774 = vmatpush2.bf16.msra.mxu0 %v1181
    %1775 = vmatprep.subr.bf16.mxu0 %v1178
    %1776 = vmatpush2.bf16.msra.mxu0 %v1177
    %1777 = vmatprep.subr.bf16.mxu0 %v1174
    %1778 = vmatpush2.bf16.msra.mxu0 %v1173
    %1779 = vmatprep.subr.bf16.mxu0 %v1170
    %1780 = vmatpush2.bf16.msra.mxu0 %v1169
    %1781 = vmatprep.subr.bf16.mxu0 %v1166
    %1782 = vmatpush2.bf16.msra.mxu0 %v1165
    %1783 = vmatprep.mubr.bf16.mxu0 %v446
    %1784 = vmatmul.mubr.bf16.gmra.mxu0 %v445
    %v1785 = vpop.f32.mrf.mxu0
    %v1786 = vadd.f32 %v414, %v1785
    %v1787 = vpop.f32.mrf.mxu0
    %v1788 = vadd.f32 %v418, %v1787
    %v1789 = vpop.f32.mrf.mxu0
    %v1790 = vadd.f32 %v414, %v1789
    %v1791 = vpop.f32.mrf.mxu0
    %v1792 = vadd.f32 %v418, %v1791
    %1793 = vdwg.mxu0
    %1794 = vmatprep.subr.bf16.mxu0 %v1226
    %1795 = vmatpush1.bf16.msra.mxu0 %v1225
    %1796 = vmatprep.subr.bf16.mxu0 %v1222
    %1797 = vmatpush1.bf16.msra.mxu0 %v1221
    %1798 = vmatprep.subr.bf16.mxu0 %v1218
    %1799 = vmatpush1.bf16.msra.mxu0 %v1217
    %1800 = vmatprep.subr.bf16.mxu0 %v1214
    %1801 = vmatpush1.bf16.msra.mxu0 %v1213
    %1802 = vmatprep.subr.bf16.mxu0 %v1210
    %1803 = vmatpush1.bf16.msra.mxu0 %v1209
    %1804 = vmatprep.subr.bf16.mxu0 %v1206
    %1805 = vmatpush1.bf16.msra.mxu0 %v1205
    %1806 = vmatprep.subr.bf16.mxu0 %v1202
    %1807 = vmatpush1.bf16.msra.mxu0 %v1201
    %1808 = vmatprep.subr.bf16.mxu0 %v1198
    %1809 = vmatpush1.bf16.msra.mxu0 %v1197
    %1810 = vmatprep.subr.bf16.mxu0 %v1258
    %1811 = vmatpush2.bf16.msra.mxu0 %v1257
    %1812 = vmatprep.subr.bf16.mxu0 %v1254
    %1813 = vmatpush2.bf16.msra.mxu0 %v1253
    %1814 = vmatprep.subr.bf16.mxu0 %v1250
    %1815 = vmatpush2.bf16.msra.mxu0 %v1249
    %1816 = vmatprep.subr.bf16.mxu0 %v1246
    %1817 = vmatpush2.bf16.msra.mxu0 %v1245
    %1818 = vmatprep.subr.bf16.mxu0 %v1242
    %1819 = vmatpush2.bf16.msra.mxu0 %v1241
    %1820 = vmatprep.subr.bf16.mxu0 %v1238
    %1821 = vmatpush2.bf16.msra.mxu0 %v1237
    %1822 = vmatprep.subr.bf16.mxu0 %v1234
    %1823 = vmatpush2.bf16.msra.mxu0 %v1233
    %1824 = vmatprep.subr.bf16.mxu0 %v1230
    %1825 = vmatpush2.bf16.msra.mxu0 %v1229
    %1826 = vmatprep.mubr.bf16.mxu0 %v448
    %1827 = vmatmul.mubr.bf16.gmra.mxu0 %v447
    %v1828 = vpop.f32.mrf.mxu0
    %v1829 = vadd.f32 %v1786, %v1828
    %v1830 = vpop.f32.mrf.mxu0
    %v1831 = vadd.f32 %v1788, %v1830
    %v1832 = vpop.f32.mrf.mxu0
    %v1833 = vadd.f32 %v1790, %v1832
    %v1834 = vpop.f32.mrf.mxu0
    %v1835 = vadd.f32 %v1792, %v1834
    %1836 = vdwg.mxu0
    %1837 = vmatprep.subr.bf16.mxu0 %v1290
    %1838 = vmatpush1.bf16.msra.mxu0 %v1289
    %1839 = vmatprep.subr.bf16.mxu0 %v1286
    %1840 = vmatpush1.bf16.msra.mxu0 %v1285
    %1841 = vmatprep.subr.bf16.mxu0 %v1282
    %1842 = vmatpush1.bf16.msra.mxu0 %v1281
    %1843 = vmatprep.subr.bf16.mxu0 %v1278
    %1844 = vmatpush1.bf16.msra.mxu0 %v1277
    %1845 = vmatprep.subr.bf16.mxu0 %v1274
    %1846 = vmatpush1.bf16.msra.mxu0 %v1273
    %1847 = vmatprep.subr.bf16.mxu0 %v1270
    %1848 = vmatpush1.bf16.msra.mxu0 %v1269
    %1849 = vmatprep.subr.bf16.mxu0 %v1266
    %1850 = vmatpush1.bf16.msra.mxu0 %v1265
    %1851 = vmatprep.subr.bf16.mxu0 %v1262
    %1852 = vmatpush1.bf16.msra.mxu0 %v1261
    %1853 = vmatprep.subr.bf16.mxu0 %v1322
    %1854 = vmatpush2.bf16.msra.mxu0 %v1321
    %1855 = vmatprep.subr.bf16.mxu0 %v1318
    %1856 = vmatpush2.bf16.msra.mxu0 %v1317
    %1857 = vmatprep.subr.bf16.mxu0 %v1314
    %1858 = vmatpush2.bf16.msra.mxu0 %v1313
    %1859 = vmatprep.subr.bf16.mxu0 %v1310
    %1860 = vmatpush2.bf16.msra.mxu0 %v1309
    %1861 = vmatprep.subr.bf16.mxu0 %v1306
    %1862 = vmatpush2.bf16.msra.mxu0 %v1305
    %1863 = vmatprep.subr.bf16.mxu0 %v1302
    %1864 = vmatpush2.bf16.msra.mxu0 %v1301
    %1865 = vmatprep.subr.bf16.mxu0 %v1298
    %1866 = vmatpush2.bf16.msra.mxu0 %v1297
    %1867 = vmatprep.subr.bf16.mxu0 %v1294
    %1868 = vmatpush2.bf16.msra.mxu0 %v1293
    %1869 = vmatprep.mubr.bf16.mxu0 %v450
    %1870 = vmatmul.mubr.bf16.gmra.mxu0 %v449
    %v1871 = vpop.f32.mrf.mxu0
    %v1872 = vadd.f32 %v1829, %v1871
    %v1873 = vpop.f32.mrf.mxu0
    %v1874 = vadd.f32 %v1831, %v1873
    %v1875 = vpop.f32.mrf.mxu0
    %v1876 = vadd.f32 %v1833, %v1875
    %v1877 = vpop.f32.mrf.mxu0
    %v1878 = vadd.f32 %v1835, %v1877
    %1879 = vdwg.mxu0
    %1880 = vmatprep.subr.bf16.mxu0 %v1354
    %1881 = vmatpush1.bf16.msra.mxu0 %v1353
    %1882 = vmatprep.subr.bf16.mxu0 %v1350
    %1883 = vmatpush1.bf16.msra.mxu0 %v1349
    %1884 = vmatprep.subr.bf16.mxu0 %v1346
    %1885 = vmatpush1.bf16.msra.mxu0 %v1345
    %1886 = vmatprep.subr.bf16.mxu0 %v1342
    %1887 = vmatpush1.bf16.msra.mxu0 %v1341
    %1888 = vmatprep.subr.bf16.mxu0 %v1338
    %1889 = vmatpush1.bf16.msra.mxu0 %v1337
    %1890 = vmatprep.subr.bf16.mxu0 %v1334
    %1891 = vmatpush1.bf16.msra.mxu0 %v1333
    %1892 = vmatprep.subr.bf16.mxu0 %v1330
    %1893 = vmatpush1.bf16.msra.mxu0 %v1329
    %1894 = vmatprep.subr.bf16.mxu0 %v1326
    %1895 = vmatpush1.bf16.msra.mxu0 %v1325
    %1896 = vmatprep.subr.bf16.mxu0 0
    %1897 = vmatpush2.bf16.msra.mxu0 0
    %1898 = vmatprep.subr.bf16.mxu0 0
    %1899 = vmatpush2.bf16.msra.mxu0 0
    %1900 = vmatprep.subr.bf16.mxu0 0
    %1901 = vmatpush2.bf16.msra.mxu0 0
    %1902 = vmatprep.subr.bf16.mxu0 0
    %1903 = vmatpush2.bf16.msra.mxu0 0
    %1904 = vmatprep.subr.bf16.mxu0 0
    %1905 = vmatpush2.bf16.msra.mxu0 0
    %1906 = vmatprep.subr.bf16.mxu0 0
    %1907 = vmatpush2.bf16.msra.mxu0 0
    %1908 = vmatprep.subr.bf16.mxu0 0
    %1909 = vmatpush2.bf16.msra.mxu0 0
    %1910 = vmatprep.subr.bf16.mxu0 0
    %1911 = vmatpush2.bf16.msra.mxu0 0
    %1912 = vmatprep.mubr.bf16.mxu0 0
    %1913 = vmatmul.mubr.bf16.gmra.mxu0 %v451
    %v1914 = vpop.f32.mrf.mxu0
    %v1915 = vadd.f32 %v1872, %v1914
    %v1916 = vpop.f32.mrf.mxu0
    %v1917 = vadd.f32 %v1874, %v1916
    %v1918 = vpop.f32.mrf.mxu0
    %v1919 = vadd.f32 %v1876, %v1918
    %v1920 = vpop.f32.mrf.mxu0
    %v1921 = vadd.f32 %v1878, %v1920
    %1922 = vdwg.mxu0
    %v1923 = vmax.f32 %v1743, 0.0
    %v1924 = vmax.f32 %v1745, 0.0
    %v1925 = vmax.f32 %v1915, 0.0
    %v1926 = vmax.f32 %v1917, 0.0
    %v1927 = vmax.f32 %v1747, 0.0
    %v1928 = vmax.f32 %v1749, 0.0
    %v1929 = vmax.f32 %v1919, 0.0
    %v1930 = vmax.f32 %v1921, 0.0
    %v1931 = vpack.c.bf16 %v1927, %v1923
    %v1932 = vpack.c.bf16 %v1928, %v1924
    %v1933 = vpack.c.bf16 %v1929, %v1925
    %v1934 = vpack.c.bf16 %v1930, %v1926
    %v1935 = vld [vmem:[#allocation9] sm:$0xff]
    %v1936 = vld [vmem:[#allocation9 + $0x8] sm:$0xff]
    %v1937 = vld [vmem:[#allocation9 + $0x10] sm:$0xff]
    %v1938 = vld [vmem:[#allocation9 + $0x18] sm:$0xff]
    %v1939 = vld [vmem:[#allocation9 + $0x20] sm:$0xff]
    %v1940 = vld [vmem:[#allocation9 + $0x28] sm:$0xff]
    %v1941 = vld [vmem:[#allocation9 + $0x30] sm:$0xff]
    %v1942 = vld [vmem:[#allocation9 + $0x38] sm:$0xff]
    %v1943 = vld [vmem:[#allocation9 + $0x40] sm:$0xff]
    %v1944 = vld [vmem:[#allocation9 + $0x48] sm:$0xff]
    %v1945 = vld [vmem:[#allocation9 + $0x50] sm:$0xff]
    %v1946 = vld [vmem:[#allocation9 + $0x58] sm:$0xff]
    %v1947 = vld [vmem:[#allocation9 + $0x60] sm:$0xff]
    %v1948 = vld [vmem:[#allocation9 + $0x68] sm:$0xff]
    %v1949 = vld [vmem:[#allocation9 + $0x70] sm:$0xff]
    %v1950 = vld [vmem:[#allocation9 + $0x78] sm:$0xff]
    %v1951 = vld [vmem:[#allocation9 + $0x80] sm:$0xff]
    %v1952 = vld [vmem:[#allocation9 + $0x88] sm:$0xff]
    %v1953 = vld [vmem:[#allocation9 + $0x90] sm:$0xff]
    %v1954 = vld [vmem:[#allocation9 + $0x98] sm:$0xff]
    %v1955 = vld [vmem:[#allocation9 + $0xa0] sm:$0xff]
    %v1956 = vld [vmem:[#allocation9 + $0xa8] sm:$0xff]
    %v1957 = vld [vmem:[#allocation9 + $0xb0] sm:$0xff]
    %v1958 = vld [vmem:[#allocation9 + $0xb8] sm:$0xff]
    %v1959 = vld [vmem:[#allocation9 + $0xc0] sm:$0xff]
    %v1960 = vld [vmem:[#allocation9 + $0xc8] sm:$0xff]
    %v1961 = vld [vmem:[#allocation9 + $0xd0] sm:$0xff]
    %v1962 = vld [vmem:[#allocation9 + $0xd8] sm:$0xff]
    %v1963 = vld [vmem:[#allocation9 + $0xe0] sm:$0xff]
    %v1964 = vld [vmem:[#allocation9 + $0xe8] sm:$0xff]
    %v1965 = vld [vmem:[#allocation9 + $0xf0] sm:$0xff]
    %v1966 = vld [vmem:[#allocation9 + $0xf8] sm:$0xff]
    %v1967 = vld [vmem:[#allocation9 + $0x100] sm:$0xff]
    %v1968 = vld [vmem:[#allocation9 + $0x108] sm:$0xff]
    %v1969 = vld [vmem:[#allocation9 + $0x110] sm:$0xff]
    %v1970 = vld [vmem:[#allocation9 + $0x118] sm:$0xff]
    %v1971 = vld [vmem:[#allocation9 + $0x120] sm:$0xff]
    %v1972 = vld [vmem:[#allocation9 + $0x128] sm:$0xff]
    %v1973 = vld [vmem:[#allocation9 + $0x130] sm:$0xff]
    %v1974 = vld [vmem:[#allocation9 + $0x138] sm:$0xff]
    %v1975 = vld [vmem:[#allocation9 + $0x140] sm:$0xff]
    %v1976 = vld [vmem:[#allocation9 + $0x148] sm:$0xff]
    %v1977 = vld [vmem:[#allocation9 + $0x150] sm:$0xff]
    %v1978 = vld [vmem:[#allocation9 + $0x158] sm:$0xff]
    %v1979 = vld [vmem:[#allocation9 + $0x160] sm:$0xff]
    %v1980 = vld [vmem:[#allocation9 + $0x168] sm:$0xff]
    %v1981 = vld [vmem:[#allocation9 + $0x170] sm:$0xff]
    %v1982 = vld [vmem:[#allocation9 + $0x178] sm:$0xff]
    %v1983 = vld [vmem:[#allocation9 + $0x180] sm:$0xff]
    %v1984 = vld [vmem:[#allocation9 + $0x188] sm:$0xff]
    %v1985 = vld [vmem:[#allocation9 + $0x190] sm:$0xff]
    %v1986 = vld [vmem:[#allocation9 + $0x198] sm:$0xff]
    %v1987 = vld [vmem:[#allocation9 + $0x1a0] sm:$0xff]
    %v1988 = vld [vmem:[#allocation9 + $0x1a8] sm:$0xff]
    %v1989 = vld [vmem:[#allocation9 + $0x1b0] sm:$0xff]
    %v1990 = vld [vmem:[#allocation9 + $0x1b8] sm:$0xff]
    %v1991 = vld [vmem:[#allocation9 + $0x1c0] sm:$0xff]
    %v1992 = vld [vmem:[#allocation9 + $0x1c8] sm:$0xff]
    %v1993 = vld [vmem:[#allocation9 + $0x1d0] sm:$0xff]
    %v1994 = vld [vmem:[#allocation9 + $0x1d8] sm:$0xff]
    %v1995 = vld [vmem:[#allocation9 + $0x1e0] sm:$0xff]
    %v1996 = vld [vmem:[#allocation9 + $0x1e8] sm:$0xff]
    %v1997 = vld [vmem:[#allocation9 + $0x1f0] sm:$0xff]
    %v1998 = vld [vmem:[#allocation9 + $0x1f8] sm:$0xff]
    %v1999 = vld [vmem:[#allocation9 + $0x200] sm:$0xff]
    %v2000 = vld [vmem:[#allocation9 + $0x208] sm:$0xff]
    %v2001 = vld [vmem:[#allocation9 + $0x210] sm:$0xff]
    %v2002 = vld [vmem:[#allocation9 + $0x218] sm:$0xff]
    %v2003 = vld [vmem:[#allocation9 + $0x220] sm:$0xff]
    %v2004 = vld [vmem:[#allocation9 + $0x228] sm:$0xff]
    %v2005 = vld [vmem:[#allocation9 + $0x230] sm:$0xff]
    %v2006 = vld [vmem:[#allocation9 + $0x238] sm:$0xff]
    %v2007 = vld [vmem:[#allocation9 + $0x240] sm:$0xff]
    %v2008 = vld [vmem:[#allocation9 + $0x248] sm:$0xff]
    %v2009 = vld [vmem:[#allocation9 + $0x250] sm:$0xff]
    %v2010 = vld [vmem:[#allocation9 + $0x258] sm:$0xff]
    %v2011 = vld [vmem:[#allocation9 + $0x260] sm:$0xff]
    %v2012 = vld [vmem:[#allocation9 + $0x268] sm:$0xff]
    %v2013 = vld [vmem:[#allocation9 + $0x270] sm:$0xff]
    %v2014 = vld [vmem:[#allocation9 + $0x278] sm:$0xff]
    %v2015 = vld [vmem:[#allocation9 + $0x280] sm:$0xff]
    %v2016 = vld [vmem:[#allocation9 + $0x288] sm:$0xff]
    %v2017 = vld [vmem:[#allocation9 + $0x290] sm:$0xff]
    %v2018 = vld [vmem:[#allocation9 + $0x298] sm:$0xff]
    %v2019 = vld [vmem:[#allocation9 + $0x2a0] sm:$0xff]
    %v2020 = vld [vmem:[#allocation9 + $0x2a8] sm:$0xff]
    %v2021 = vld [vmem:[#allocation9 + $0x2b0] sm:$0xff]
    %v2022 = vld [vmem:[#allocation9 + $0x2b8] sm:$0xff]
    %v2023 = vld [vmem:[#allocation9 + $0x2c0] sm:$0xff]
    %v2024 = vld [vmem:[#allocation9 + $0x2c8] sm:$0xff]
    %v2025 = vld [vmem:[#allocation9 + $0x2d0] sm:$0xff]
    %v2026 = vld [vmem:[#allocation9 + $0x2d8] sm:$0xff]
    %v2027 = vld [vmem:[#allocation9 + $0x2e0] sm:$0xff]
    %v2028 = vld [vmem:[#allocation9 + $0x2e8] sm:$0xff]
    %v2029 = vld [vmem:[#allocation9 + $0x2f0] sm:$0xff]
    %v2030 = vld [vmem:[#allocation9 + $0x2f8] sm:$0xff]
    %v2031 = vld [vmem:[#allocation9 + $0x300] sm:$0xff]
    %v2032 = vld [vmem:[#allocation9 + $0x308] sm:$0xff]
    %v2033 = vld [vmem:[#allocation9 + $0x310] sm:$0xff]
    %v2034 = vld [vmem:[#allocation9 + $0x318] sm:$0xff]
    %v2035 = vld [vmem:[#allocation9 + $0x320] sm:$0xff]
    %v2036 = vld [vmem:[#allocation9 + $0x328] sm:$0xff]
    %v2037 = vld [vmem:[#allocation9 + $0x330] sm:$0xff]
    %v2038 = vld [vmem:[#allocation9 + $0x338] sm:$0xff]
    %v2039 = vld [vmem:[#allocation9 + $0x340] sm:$0xff]
    %v2040 = vld [vmem:[#allocation9 + $0x348] sm:$0xff]
    %v2041 = vld [vmem:[#allocation9 + $0x350] sm:$0xff]
    %v2042 = vld [vmem:[#allocation9 + $0x358] sm:$0xff]
    %v2043 = vld [vmem:[#allocation9 + $0x360] sm:$0xff]
    %v2044 = vld [vmem:[#allocation9 + $0x368] sm:$0xff]
    %v2045 = vld [vmem:[#allocation9 + $0x370] sm:$0xff]
    %v2046 = vld [vmem:[#allocation9 + $0x378] sm:$0xff]
    %v2047 = vld [vmem:[#allocation9 + $0x380] sm:$0xff]
    %v2048 = vld [vmem:[#allocation9 + $0x388] sm:$0xff]
    %v2049 = vld [vmem:[#allocation9 + $0x390] sm:$0xff]
    %v2050 = vld [vmem:[#allocation9 + $0x398] sm:$0xff]
    %v2051 = vld [vmem:[#allocation9 + $0x3a0] sm:$0xff]
    %v2052 = vld [vmem:[#allocation9 + $0x3a8] sm:$0xff]
    %v2053 = vld [vmem:[#allocation9 + $0x3b0] sm:$0xff]
    %v2054 = vld [vmem:[#allocation9 + $0x3b8] sm:$0xff]
    %v2055 = vld [vmem:[#allocation9 + $0x3c0] sm:$0xff]
    %v2056 = vld [vmem:[#allocation9 + $0x3c8] sm:$0xff]
    %v2057 = vld [vmem:[#allocation9 + $0x3d0] sm:$0xff]
    %v2058 = vld [vmem:[#allocation9 + $0x3d8] sm:$0xff]
    %v2059 = vld [vmem:[#allocation9 + $0x3e0] sm:$0xff]
    %v2060 = vld [vmem:[#allocation9 + $0x3e8] sm:$0xff]
    %v2061 = vld [vmem:[#allocation9 + $0x3f0] sm:$0xff]
    %v2062 = vld [vmem:[#allocation9 + $0x3f8] sm:$0xff]
    %v2063 = vld [vmem:[%s4] sm:$0xf]
    %v2065 = vlaneseq
    %v2066 = vshrl.u32 %v2065, 7
    %v2067 = vsub.s32 0, %v2066
    %v2068 = vrot.slane %v2063, %v2067
    %v2069 = vlaneseq
    %v2070 = vshrl.u32 %v2069, 7
    %v2071 = vsub.s32 1, %v2070
    %v2072 = vrot.slane %v2063, %v2071
    %v2073 = vlaneseq
    %v2074 = vshrl.u32 %v2073, 7
    %v2075 = vsub.s32 2, %v2074
    %v2076 = vrot.slane %v2063, %v2075
    %v2077 = vlaneseq
    %v2078 = vshrl.u32 %v2077, 7
    %v2079 = vsub.s32 3, %v2078
    %v2080 = vrot.slane %v2063, %v2079
    %v2213 = vunpack.c.l.b16 %v1935
    %v2214 = vunpack.c.h.b16 %v1935
    %v2215 = vunpack.c.l.b16 %v1936
    %v2216 = vunpack.c.h.b16 %v1936
    %v2217 = vunpack.c.l.b16 %v1937
    %v2218 = vunpack.c.h.b16 %v1937
    %v2219 = vunpack.c.l.b16 %v1938
    %v2220 = vunpack.c.h.b16 %v1938
    %v2221 = vunpack.c.l.b16 %v1939
    %v2222 = vunpack.c.h.b16 %v1939
    %v2223 = vunpack.c.l.b16 %v1940
    %v2224 = vunpack.c.h.b16 %v1940
    %v2225 = vunpack.c.l.b16 %v1941
    %v2226 = vunpack.c.h.b16 %v1941
    %v2227 = vunpack.c.l.b16 %v1942
    %v2228 = vunpack.c.h.b16 %v1942
    %v2229 = vunpack.c.l.b16 %v1943
    %v2230 = vunpack.c.h.b16 %v1943
    %v2231 = vunpack.c.l.b16 %v1944
    %v2232 = vunpack.c.h.b16 %v1944
    %v2233 = vunpack.c.l.b16 %v1945
    %v2234 = vunpack.c.h.b16 %v1945
    %v2235 = vunpack.c.l.b16 %v1946
    %v2236 = vunpack.c.h.b16 %v1946
    %v2237 = vunpack.c.l.b16 %v1947
    %v2238 = vunpack.c.h.b16 %v1947
    %v2239 = vunpack.c.l.b16 %v1948
    %v2240 = vunpack.c.h.b16 %v1948
    %v2241 = vunpack.c.l.b16 %v1949
    %v2242 = vunpack.c.h.b16 %v1949
    %v2243 = vunpack.c.l.b16 %v1950
    %v2244 = vunpack.c.h.b16 %v1950
    %v2245 = vunpack.c.l.b16 %v1951
    %v2246 = vunpack.c.h.b16 %v1951
    %v2247 = vunpack.c.l.b16 %v1952
    %v2248 = vunpack.c.h.b16 %v1952
    %v2249 = vunpack.c.l.b16 %v1953
    %v2250 = vunpack.c.h.b16 %v1953
    %v2251 = vunpack.c.l.b16 %v1954
    %v2252 = vunpack.c.h.b16 %v1954
    %v2253 = vunpack.c.l.b16 %v1955
    %v2254 = vunpack.c.h.b16 %v1955
    %v2255 = vunpack.c.l.b16 %v1956
    %v2256 = vunpack.c.h.b16 %v1956
    %v2257 = vunpack.c.l.b16 %v1957
    %v2258 = vunpack.c.h.b16 %v1957
    %v2259 = vunpack.c.l.b16 %v1958
    %v2260 = vunpack.c.h.b16 %v1958
    %v2261 = vunpack.c.l.b16 %v1959
    %v2262 = vunpack.c.h.b16 %v1959
    %v2263 = vunpack.c.l.b16 %v1960
    %v2264 = vunpack.c.h.b16 %v1960
    %v2265 = vunpack.c.l.b16 %v1961
    %v2266 = vunpack.c.h.b16 %v1961
    %v2267 = vunpack.c.l.b16 %v1962
    %v2268 = vunpack.c.h.b16 %v1962
    %v2269 = vunpack.c.l.b16 %v1963
    %v2270 = vunpack.c.h.b16 %v1963
    %v2271 = vunpack.c.l.b16 %v1964
    %v2272 = vunpack.c.h.b16 %v1964
    %v2273 = vunpack.c.l.b16 %v1965
    %v2274 = vunpack.c.h.b16 %v1965
    %v2275 = vunpack.c.l.b16 %v1966
    %v2276 = vunpack.c.h.b16 %v1966
    %v2277 = vunpack.c.l.b16 %v1967
    %v2278 = vunpack.c.h.b16 %v1967
    %v2279 = vunpack.c.l.b16 %v1968
    %v2280 = vunpack.c.h.b16 %v1968
    %v2281 = vunpack.c.l.b16 %v1969
    %v2282 = vunpack.c.h.b16 %v1969
    %v2283 = vunpack.c.l.b16 %v1970
    %v2284 = vunpack.c.h.b16 %v1970
    %v2285 = vunpack.c.l.b16 %v1971
    %v2286 = vunpack.c.h.b16 %v1971
    %v2287 = vunpack.c.l.b16 %v1972
    %v2288 = vunpack.c.h.b16 %v1972
    %v2289 = vunpack.c.l.b16 %v1973
    %v2290 = vunpack.c.h.b16 %v1973
    %v2291 = vunpack.c.l.b16 %v1974
    %v2292 = vunpack.c.h.b16 %v1974
    %v2293 = vunpack.c.l.b16 %v1975
    %v2294 = vunpack.c.h.b16 %v1975
    %v2295 = vunpack.c.l.b16 %v1976
    %v2296 = vunpack.c.h.b16 %v1976
    %v2297 = vunpack.c.l.b16 %v1977
    %v2298 = vunpack.c.h.b16 %v1977
    %v2299 = vunpack.c.l.b16 %v1978
    %v2300 = vunpack.c.h.b16 %v1978
    %v2301 = vunpack.c.l.b16 %v1979
    %v2302 = vunpack.c.h.b16 %v1979
    %v2303 = vunpack.c.l.b16 %v1980
    %v2304 = vunpack.c.h.b16 %v1980
    %v2305 = vunpack.c.l.b16 %v1981
    %v2306 = vunpack.c.h.b16 %v1981
    %v2307 = vunpack.c.l.b16 %v1982
    %v2308 = vunpack.c.h.b16 %v1982
    %v2309 = vunpack.c.l.b16 %v1983
    %v2310 = vunpack.c.h.b16 %v1983
    %v2311 = vunpack.c.l.b16 %v1984
    %v2312 = vunpack.c.h.b16 %v1984
    %v2313 = vunpack.c.l.b16 %v1985
    %v2314 = vunpack.c.h.b16 %v1985
    %v2315 = vunpack.c.l.b16 %v1986
    %v2316 = vunpack.c.h.b16 %v1986
    %v2317 = vunpack.c.l.b16 %v1987
    %v2318 = vunpack.c.h.b16 %v1987
    %v2319 = vunpack.c.l.b16 %v1988
    %v2320 = vunpack.c.h.b16 %v1988
    %v2321 = vunpack.c.l.b16 %v1989
    %v2322 = vunpack.c.h.b16 %v1989
    %v2323 = vunpack.c.l.b16 %v1990
    %v2324 = vunpack.c.h.b16 %v1990
    %v2325 = vunpack.c.l.b16 %v1991
    %v2326 = vunpack.c.h.b16 %v1991
    %v2327 = vunpack.c.l.b16 %v1992
    %v2328 = vunpack.c.h.b16 %v1992
    %v2329 = vunpack.c.l.b16 %v1993
    %v2330 = vunpack.c.h.b16 %v1993
    %v2331 = vunpack.c.l.b16 %v1994
    %v2332 = vunpack.c.h.b16 %v1994
    %v2333 = vunpack.c.l.b16 %v1995
    %v2334 = vunpack.c.h.b16 %v1995
    %v2335 = vunpack.c.l.b16 %v1996
    %v2336 = vunpack.c.h.b16 %v1996
    %v2337 = vunpack.c.l.b16 %v1997
    %v2338 = vunpack.c.h.b16 %v1997
    %v2339 = vunpack.c.l.b16 %v1998
    %v2340 = vunpack.c.h.b16 %v1998
    %v2341 = vunpack.c.l.b16 %v1999
    %v2342 = vunpack.c.h.b16 %v1999
    %v2343 = vunpack.c.l.b16 %v2000
    %v2344 = vunpack.c.h.b16 %v2000
    %v2345 = vunpack.c.l.b16 %v2001
    %v2346 = vunpack.c.h.b16 %v2001
    %v2347 = vunpack.c.l.b16 %v2002
    %v2348 = vunpack.c.h.b16 %v2002
    %v2349 = vunpack.c.l.b16 %v2003
    %v2350 = vunpack.c.h.b16 %v2003
    %v2351 = vunpack.c.l.b16 %v2004
    %v2352 = vunpack.c.h.b16 %v2004
    %v2353 = vunpack.c.l.b16 %v2005
    %v2354 = vunpack.c.h.b16 %v2005
    %v2355 = vunpack.c.l.b16 %v2006
    %v2356 = vunpack.c.h.b16 %v2006
    %v2357 = vunpack.c.l.b16 %v2007
    %v2358 = vunpack.c.h.b16 %v2007
    %v2359 = vunpack.c.l.b16 %v2008
    %v2360 = vunpack.c.h.b16 %v2008
    %v2361 = vunpack.c.l.b16 %v2009
    %v2362 = vunpack.c.h.b16 %v2009
    %v2363 = vunpack.c.l.b16 %v2010
    %v2364 = vunpack.c.h.b16 %v2010
    %v2365 = vunpack.c.l.b16 %v2011
    %v2366 = vunpack.c.h.b16 %v2011
    %v2367 = vunpack.c.l.b16 %v2012
    %v2368 = vunpack.c.h.b16 %v2012
    %v2369 = vunpack.c.l.b16 %v2013
    %v2370 = vunpack.c.h.b16 %v2013
    %v2371 = vunpack.c.l.b16 %v2014
    %v2372 = vunpack.c.h.b16 %v2014
    %v2373 = vunpack.c.l.b16 %v2015
    %v2374 = vunpack.c.h.b16 %v2015
    %v2375 = vunpack.c.l.b16 %v2016
    %v2376 = vunpack.c.h.b16 %v2016
    %v2377 = vunpack.c.l.b16 %v2017
    %v2378 = vunpack.c.h.b16 %v2017
    %v2379 = vunpack.c.l.b16 %v2018
    %v2380 = vunpack.c.h.b16 %v2018
    %v2381 = vunpack.c.l.b16 %v2019
    %v2382 = vunpack.c.h.b16 %v2019
    %v2383 = vunpack.c.l.b16 %v2020
    %v2384 = vunpack.c.h.b16 %v2020
    %v2385 = vunpack.c.l.b16 %v2021
    %v2386 = vunpack.c.h.b16 %v2021
    %v2387 = vunpack.c.l.b16 %v2022
    %v2388 = vunpack.c.h.b16 %v2022
    %v2389 = vunpack.c.l.b16 %v2023
    %v2390 = vunpack.c.h.b16 %v2023
    %v2391 = vunpack.c.l.b16 %v2024
    %v2392 = vunpack.c.h.b16 %v2024
    %v2393 = vunpack.c.l.b16 %v2025
    %v2394 = vunpack.c.h.b16 %v2025
    %v2395 = vunpack.c.l.b16 %v2026
    %v2396 = vunpack.c.h.b16 %v2026
    %v2397 = vunpack.c.l.b16 %v2027
    %v2398 = vunpack.c.h.b16 %v2027
    %v2399 = vunpack.c.l.b16 %v2028
    %v2400 = vunpack.c.h.b16 %v2028
    %v2401 = vunpack.c.l.b16 %v2029
    %v2402 = vunpack.c.h.b16 %v2029
    %v2403 = vunpack.c.l.b16 %v2030
    %v2404 = vunpack.c.h.b16 %v2030
    %v2405 = vunpack.c.l.b16 %v2031
    %v2406 = vunpack.c.h.b16 %v2031
    %v2407 = vunpack.c.l.b16 %v2032
    %v2408 = vunpack.c.h.b16 %v2032
    %v2409 = vunpack.c.l.b16 %v2033
    %v2410 = vunpack.c.h.b16 %v2033
    %v2411 = vunpack.c.l.b16 %v2034
    %v2412 = vunpack.c.h.b16 %v2034
    %v2413 = vunpack.c.l.b16 %v2035
    %v2414 = vunpack.c.h.b16 %v2035
    %v2415 = vunpack.c.l.b16 %v2036
    %v2416 = vunpack.c.h.b16 %v2036
    %v2417 = vunpack.c.l.b16 %v2037
    %v2418 = vunpack.c.h.b16 %v2037
    %v2419 = vunpack.c.l.b16 %v2038
    %v2420 = vunpack.c.h.b16 %v2038
    %v2421 = vunpack.c.l.b16 %v2039
    %v2422 = vunpack.c.h.b16 %v2039
    %v2423 = vunpack.c.l.b16 %v2040
    %v2424 = vunpack.c.h.b16 %v2040
    %v2425 = vunpack.c.l.b16 %v2041
    %v2426 = vunpack.c.h.b16 %v2041
    %v2427 = vunpack.c.l.b16 %v2042
    %v2428 = vunpack.c.h.b16 %v2042
    %v2429 = vunpack.c.l.b16 %v2043
    %v2430 = vunpack.c.h.b16 %v2043
    %v2431 = vunpack.c.l.b16 %v2044
    %v2432 = vunpack.c.h.b16 %v2044
    %v2433 = vunpack.c.l.b16 %v2045
    %v2434 = vunpack.c.h.b16 %v2045
    %v2435 = vunpack.c.l.b16 %v2046
    %v2436 = vunpack.c.h.b16 %v2046
    %v2437 = vunpack.c.l.b16 %v2047
    %v2438 = vunpack.c.h.b16 %v2047
    %v2439 = vunpack.c.l.b16 %v2048
    %v2440 = vunpack.c.h.b16 %v2048
    %v2441 = vunpack.c.l.b16 %v2049
    %v2442 = vunpack.c.h.b16 %v2049
    %v2443 = vunpack.c.l.b16 %v2050
    %v2444 = vunpack.c.h.b16 %v2050
    %v2445 = vunpack.c.l.b16 %v2051
    %v2446 = vunpack.c.h.b16 %v2051
    %v2447 = vunpack.c.l.b16 %v2052
    %v2448 = vunpack.c.h.b16 %v2052
    %v2449 = vunpack.c.l.b16 %v2053
    %v2450 = vunpack.c.h.b16 %v2053
    %v2451 = vunpack.c.l.b16 %v2054
    %v2452 = vunpack.c.h.b16 %v2054
    %v2453 = vunpack.c.l.b16 %v2055
    %v2454 = vunpack.c.h.b16 %v2055
    %v2455 = vunpack.c.l.b16 %v2056
    %v2456 = vunpack.c.h.b16 %v2056
    %v2457 = vunpack.c.l.b16 %v2057
    %v2458 = vunpack.c.h.b16 %v2057
    %v2459 = vunpack.c.l.b16 %v2058
    %v2460 = vunpack.c.h.b16 %v2058
    %v2461 = vunpack.c.l.b16 %v2059
    %v2462 = vunpack.c.h.b16 %v2059
    %v2463 = vunpack.c.l.b16 %v2060
    %v2464 = vunpack.c.h.b16 %v2060
    %v2465 = vunpack.c.l.b16 %v2061
    %v2466 = vunpack.c.h.b16 %v2061
    %v2467 = vunpack.c.l.b16 %v2062
    %v2468 = vunpack.c.h.b16 %v2062
    %v2469 = vpack.c.b16 %v2217, %v2213
    %v2470 = vpack.c.b16 %v2218, %v2214
    %v2471 = vpack.c.b16 %v2219, %v2215
    %v2472 = vpack.c.b16 %v2220, %v2216
    %v2473 = vpack.c.b16 %v2225, %v2221
    %v2474 = vpack.c.b16 %v2226, %v2222
    %v2475 = vpack.c.b16 %v2227, %v2223
    %v2476 = vpack.c.b16 %v2228, %v2224
    %v2477 = vpack.c.b16 %v2233, %v2229
    %v2478 = vpack.c.b16 %v2234, %v2230
    %v2479 = vpack.c.b16 %v2235, %v2231
    %v2480 = vpack.c.b16 %v2236, %v2232
    %v2481 = vpack.c.b16 %v2241, %v2237
    %v2482 = vpack.c.b16 %v2242, %v2238
    %v2483 = vpack.c.b16 %v2243, %v2239
    %v2484 = vpack.c.b16 %v2244, %v2240
    %v2485 = vpack.c.b16 %v2249, %v2245
    %v2486 = vpack.c.b16 %v2250, %v2246
    %v2487 = vpack.c.b16 %v2251, %v2247
    %v2488 = vpack.c.b16 %v2252, %v2248
    %v2489 = vpack.c.b16 %v2257, %v2253
    %v2490 = vpack.c.b16 %v2258, %v2254
    %v2491 = vpack.c.b16 %v2259, %v2255
    %v2492 = vpack.c.b16 %v2260, %v2256
    %v2493 = vpack.c.b16 %v2265, %v2261
    %v2494 = vpack.c.b16 %v2266, %v2262
    %v2495 = vpack.c.b16 %v2267, %v2263
    %v2496 = vpack.c.b16 %v2268, %v2264
    %v2497 = vpack.c.b16 %v2273, %v2269
    %v2498 = vpack.c.b16 %v2274, %v2270
    %v2499 = vpack.c.b16 %v2275, %v2271
    %v2500 = vpack.c.b16 %v2276, %v2272
    %v2501 = vpack.c.b16 %v2281, %v2277
    %v2502 = vpack.c.b16 %v2282, %v2278
    %v2503 = vpack.c.b16 %v2283, %v2279
    %v2504 = vpack.c.b16 %v2284, %v2280
    %v2505 = vpack.c.b16 %v2289, %v2285
    %v2506 = vpack.c.b16 %v2290, %v2286
    %v2507 = vpack.c.b16 %v2291, %v2287
    %v2508 = vpack.c.b16 %v2292, %v2288
    %v2509 = vpack.c.b16 %v2297, %v2293
    %v2510 = vpack.c.b16 %v2298, %v2294
    %v2511 = vpack.c.b16 %v2299, %v2295
    %v2512 = vpack.c.b16 %v2300, %v2296
    %v2513 = vpack.c.b16 %v2305, %v2301
    %v2514 = vpack.c.b16 %v2306, %v2302
    %v2515 = vpack.c.b16 %v2307, %v2303
    %v2516 = vpack.c.b16 %v2308, %v2304
    %v2517 = vpack.c.b16 %v2313, %v2309
    %v2518 = vpack.c.b16 %v2314, %v2310
    %v2519 = vpack.c.b16 %v2315, %v2311
    %v2520 = vpack.c.b16 %v2316, %v2312
    %v2521 = vpack.c.b16 %v2321, %v2317
    %v2522 = vpack.c.b16 %v2322, %v2318
    %v2523 = vpack.c.b16 %v2323, %v2319
    %v2524 = vpack.c.b16 %v2324, %v2320
    %v2525 = vpack.c.b16 %v2329, %v2325
    %v2526 = vpack.c.b16 %v2330, %v2326
    %v2527 = vpack.c.b16 %v2331, %v2327
    %v2528 = vpack.c.b16 %v2332, %v2328
    %v2529 = vpack.c.b16 %v2337, %v2333
    %v2530 = vpack.c.b16 %v2338, %v2334
    %v2531 = vpack.c.b16 %v2339, %v2335
    %v2532 = vpack.c.b16 %v2340, %v2336
    %v2533 = vpack.c.b16 %v2345, %v2341
    %v2534 = vpack.c.b16 %v2346, %v2342
    %v2535 = vpack.c.b16 %v2347, %v2343
    %v2536 = vpack.c.b16 %v2348, %v2344
    %v2537 = vpack.c.b16 %v2353, %v2349
    %v2538 = vpack.c.b16 %v2354, %v2350
    %v2539 = vpack.c.b16 %v2355, %v2351
    %v2540 = vpack.c.b16 %v2356, %v2352
    %v2541 = vpack.c.b16 %v2361, %v2357
    %v2542 = vpack.c.b16 %v2362, %v2358
    %v2543 = vpack.c.b16 %v2363, %v2359
    %v2544 = vpack.c.b16 %v2364, %v2360
    %v2545 = vpack.c.b16 %v2369, %v2365
    %v2546 = vpack.c.b16 %v2370, %v2366
    %v2547 = vpack.c.b16 %v2371, %v2367
    %v2548 = vpack.c.b16 %v2372, %v2368
    %v2549 = vpack.c.b16 %v2377, %v2373
    %v2550 = vpack.c.b16 %v2378, %v2374
    %v2551 = vpack.c.b16 %v2379, %v2375
    %v2552 = vpack.c.b16 %v2380, %v2376
    %v2553 = vpack.c.b16 %v2385, %v2381
    %v2554 = vpack.c.b16 %v2386, %v2382
    %v2555 = vpack.c.b16 %v2387, %v2383
    %v2556 = vpack.c.b16 %v2388, %v2384
    %v2557 = vpack.c.b16 %v2393, %v2389
    %v2558 = vpack.c.b16 %v2394, %v2390
    %v2559 = vpack.c.b16 %v2395, %v2391
    %v2560 = vpack.c.b16 %v2396, %v2392
    %v2561 = vpack.c.b16 %v2401, %v2397
    %v2562 = vpack.c.b16 %v2402, %v2398
    %v2563 = vpack.c.b16 %v2403, %v2399
    %v2564 = vpack.c.b16 %v2404, %v2400
    %v2565 = vpack.c.b16 %v2409, %v2405
    %v2566 = vpack.c.b16 %v2410, %v2406
    %v2567 = vpack.c.b16 %v2411, %v2407
    %v2568 = vpack.c.b16 %v2412, %v2408
    %v2569 = vpack.c.b16 %v2417, %v2413
    %v2570 = vpack.c.b16 %v2418, %v2414
    %v2571 = vpack.c.b16 %v2419, %v2415
    %v2572 = vpack.c.b16 %v2420, %v2416
    %v2573 = vpack.c.b16 %v2425, %v2421
    %v2574 = vpack.c.b16 %v2426, %v2422
    %v2575 = vpack.c.b16 %v2427, %v2423
    %v2576 = vpack.c.b16 %v2428, %v2424
    %v2577 = vpack.c.b16 %v2433, %v2429
    %v2578 = vpack.c.b16 %v2434, %v2430
    %v2579 = vpack.c.b16 %v2435, %v2431
    %v2580 = vpack.c.b16 %v2436, %v2432
    %v2581 = vpack.c.b16 %v2441, %v2437
    %v2582 = vpack.c.b16 %v2442, %v2438
    %v2583 = vpack.c.b16 %v2443, %v2439
    %v2584 = vpack.c.b16 %v2444, %v2440
    %v2585 = vpack.c.b16 %v2449, %v2445
    %v2586 = vpack.c.b16 %v2450, %v2446
    %v2587 = vpack.c.b16 %v2451, %v2447
    %v2588 = vpack.c.b16 %v2452, %v2448
    %v2589 = vpack.c.b16 %v2457, %v2453
    %v2590 = vpack.c.b16 %v2458, %v2454
    %v2591 = vpack.c.b16 %v2459, %v2455
    %v2592 = vpack.c.b16 %v2460, %v2456
    %v2593 = vpack.c.b16 %v2465, %v2461
    %v2594 = vpack.c.b16 %v2466, %v2462
    %v2595 = vpack.c.b16 %v2467, %v2463
    %v2596 = vpack.c.b16 %v2468, %v2464
    %2725 = vmatprep.subr.bf16.mxu0 %v2498
    %2726 = vmatpush1.bf16.msra.mxu0 %v2497
    %2727 = vmatprep.subr.bf16.mxu0 %v2494
    %2728 = vmatpush1.bf16.msra.mxu0 %v2493
    %2729 = vmatprep.subr.bf16.mxu0 %v2490
    %2730 = vmatpush1.bf16.msra.mxu0 %v2489
    %2731 = vmatprep.subr.bf16.mxu0 %v2486
    %2732 = vmatpush1.bf16.msra.mxu0 %v2485
    %2733 = vmatprep.subr.bf16.mxu0 %v2482
    %2734 = vmatpush1.bf16.msra.mxu0 %v2481
    %2735 = vmatprep.subr.bf16.mxu0 %v2478
    %2736 = vmatpush1.bf16.msra.mxu0 %v2477
    %2737 = vmatprep.subr.bf16.mxu0 %v2474
    %2738 = vmatpush1.bf16.msra.mxu0 %v2473
    %2739 = vmatprep.subr.bf16.mxu0 %v2470
    %2740 = vmatpush1.bf16.msra.mxu0 %v2469
    %2741 = vmatprep.subr.bf16.mxu0 %v2530
    %2742 = vmatpush2.bf16.msra.mxu0 %v2529
    %2743 = vmatprep.subr.bf16.mxu0 %v2526
    %2744 = vmatpush2.bf16.msra.mxu0 %v2525
    %2745 = vmatprep.subr.bf16.mxu0 %v2522
    %2746 = vmatpush2.bf16.msra.mxu0 %v2521
    %2747 = vmatprep.subr.bf16.mxu0 %v2518
    %2748 = vmatpush2.bf16.msra.mxu0 %v2517
    %2749 = vmatprep.subr.bf16.mxu0 %v2514
    %2750 = vmatpush2.bf16.msra.mxu0 %v2513
    %2751 = vmatprep.subr.bf16.mxu0 %v2510
    %2752 = vmatpush2.bf16.msra.mxu0 %v2509
    %2753 = vmatprep.subr.bf16.mxu0 %v2506
    %2754 = vmatpush2.bf16.msra.mxu0 %v2505
    %2755 = vmatprep.subr.bf16.mxu0 %v2502
    %2756 = vmatpush2.bf16.msra.mxu0 %v2501
    %2757 = vmatprep.mubr.bf16.mxu0 %v1932
    %2758 = vmatmul.mubr.bf16.gmra.mxu0 %v1931
    %v2759 = vpop.f32.mrf.mxu0
    %v2760 = vadd.f32 %v2068, %v2759
    %v2761 = vpop.f32.mrf.mxu0
    %v2762 = vadd.f32 %v2072, %v2761
    %v2763 = vpop.f32.mrf.mxu0
    %v2764 = vadd.f32 %v2068, %v2763
    %v2765 = vpop.f32.mrf.mxu0
    %v2766 = vadd.f32 %v2072, %v2765
    %2767 = vdwg.mxu0
    %2768 = vmatprep.subr.bf16.mxu0 %v2562
    %2769 = vmatpush1.bf16.msra.mxu0 %v2561
    %2770 = vmatprep.subr.bf16.mxu0 %v2558
    %2771 = vmatpush1.bf16.msra.mxu0 %v2557
    %2772 = vmatprep.subr.bf16.mxu0 %v2554
    %2773 = vmatpush1.bf16.msra.mxu0 %v2553
    %2774 = vmatprep.subr.bf16.mxu0 %v2550
    %2775 = vmatpush1.bf16.msra.mxu0 %v2549
    %2776 = vmatprep.subr.bf16.mxu0 %v2546
    %2777 = vmatpush1.bf16.msra.mxu0 %v2545
    %2778 = vmatprep.subr.bf16.mxu0 %v2542
    %2779 = vmatpush1.bf16.msra.mxu0 %v2541
    %2780 = vmatprep.subr.bf16.mxu0 %v2538
    %2781 = vmatpush1.bf16.msra.mxu0 %v2537
    %2782 = vmatprep.subr.bf16.mxu0 %v2534
    %2783 = vmatpush1.bf16.msra.mxu0 %v2533
    %2784 = vmatprep.subr.bf16.mxu0 %v2594
    %2785 = vmatpush2.bf16.msra.mxu0 %v2593
    %2786 = vmatprep.subr.bf16.mxu0 %v2590
    %2787 = vmatpush2.bf16.msra.mxu0 %v2589
    %2788 = vmatprep.subr.bf16.mxu0 %v2586
    %2789 = vmatpush2.bf16.msra.mxu0 %v2585
    %2790 = vmatprep.subr.bf16.mxu0 %v2582
    %2791 = vmatpush2.bf16.msra.mxu0 %v2581
    %2792 = vmatprep.subr.bf16.mxu0 %v2578
    %2793 = vmatpush2.bf16.msra.mxu0 %v2577
    %2794 = vmatprep.subr.bf16.mxu0 %v2574
    %2795 = vmatpush2.bf16.msra.mxu0 %v2573
    %2796 = vmatprep.subr.bf16.mxu0 %v2570
    %2797 = vmatpush2.bf16.msra.mxu0 %v2569
    %2798 = vmatprep.subr.bf16.mxu0 %v2566
    %2799 = vmatpush2.bf16.msra.mxu0 %v2565
    %2800 = vmatprep.mubr.bf16.mxu0 %v1934
    %2801 = vmatmul.mubr.bf16.gmra.mxu0 %v1933
    %v2802 = vpop.f32.mrf.mxu0
    %v2803 = vadd.f32 %v2760, %v2802
    %v2804 = vpop.f32.mrf.mxu0
    %v2805 = vadd.f32 %v2762, %v2804
    %v2806 = vpop.f32.mrf.mxu0
    %v2807 = vadd.f32 %v2764, %v2806
    %v2808 = vpop.f32.mrf.mxu0
    %v2809 = vadd.f32 %v2766, %v2808
    %2810 = vdwg.mxu0
    %2811 = vmatprep.subr.bf16.mxu0 %v2500
    %2812 = vmatpush1.bf16.msra.mxu0 %v2499
    %2813 = vmatprep.subr.bf16.mxu0 %v2496
    %2814 = vmatpush1.bf16.msra.mxu0 %v2495
    %2815 = vmatprep.subr.bf16.mxu0 %v2492
    %2816 = vmatpush1.bf16.msra.mxu0 %v2491
    %2817 = vmatprep.subr.bf16.mxu0 %v2488
    %2818 = vmatpush1.bf16.msra.mxu0 %v2487
    %2819 = vmatprep.subr.bf16.mxu0 %v2484
    %2820 = vmatpush1.bf16.msra.mxu0 %v2483
    %2821 = vmatprep.subr.bf16.mxu0 %v2480
    %2822 = vmatpush1.bf16.msra.mxu0 %v2479
    %2823 = vmatprep.subr.bf16.mxu0 %v2476
    %2824 = vmatpush1.bf16.msra.mxu0 %v2475
    %2825 = vmatprep.subr.bf16.mxu0 %v2472
    %2826 = vmatpush1.bf16.msra.mxu0 %v2471
    %2827 = vmatprep.subr.bf16.mxu0 %v2532
    %2828 = vmatpush2.bf16.msra.mxu0 %v2531
    %2829 = vmatprep.subr.bf16.mxu0 %v2528
    %2830 = vmatpush2.bf16.msra.mxu0 %v2527
    %2831 = vmatprep.subr.bf16.mxu0 %v2524
    %2832 = vmatpush2.bf16.msra.mxu0 %v2523
    %2833 = vmatprep.subr.bf16.mxu0 %v2520
    %2834 = vmatpush2.bf16.msra.mxu0 %v2519
    %2835 = vmatprep.subr.bf16.mxu0 %v2516
    %2836 = vmatpush2.bf16.msra.mxu0 %v2515
    %2837 = vmatprep.subr.bf16.mxu0 %v2512
    %2838 = vmatpush2.bf16.msra.mxu0 %v2511
    %2839 = vmatprep.subr.bf16.mxu0 %v2508
    %2840 = vmatpush2.bf16.msra.mxu0 %v2507
    %2841 = vmatprep.subr.bf16.mxu0 %v2504
    %2842 = vmatpush2.bf16.msra.mxu0 %v2503
    %2843 = vmatprep.mubr.bf16.mxu0 %v1932
    %2844 = vmatmul.mubr.bf16.gmra.mxu0 %v1931
    %v2845 = vpop.f32.mrf.mxu0
    %v2846 = vadd.f32 %v2076, %v2845
    %v2847 = vpop.f32.mrf.mxu0
    %v2848 = vadd.f32 %v2080, %v2847
    %v2849 = vpop.f32.mrf.mxu0
    %v2850 = vadd.f32 %v2076, %v2849
    %v2851 = vpop.f32.mrf.mxu0
    %v2852 = vadd.f32 %v2080, %v2851
    %2853 = vdwg.mxu0
    %2854 = vmatprep.subr.bf16.mxu0 %v2564
    %2855 = vmatpush1.bf16.msra.mxu0 %v2563
    %2856 = vmatprep.subr.bf16.mxu0 %v2560
    %2857 = vmatpush1.bf16.msra.mxu0 %v2559
    %2858 = vmatprep.subr.bf16.mxu0 %v2556
    %2859 = vmatpush1.bf16.msra.mxu0 %v2555
    %2860 = vmatprep.subr.bf16.mxu0 %v2552
    %2861 = vmatpush1.bf16.msra.mxu0 %v2551
    %2862 = vmatprep.subr.bf16.mxu0 %v2548
    %2863 = vmatpush1.bf16.msra.mxu0 %v2547
    %2864 = vmatprep.subr.bf16.mxu0 %v2544
    %2865 = vmatpush1.bf16.msra.mxu0 %v2543
    %2866 = vmatprep.subr.bf16.mxu0 %v2540
    %2867 = vmatpush1.bf16.msra.mxu0 %v2539
    %2868 = vmatprep.subr.bf16.mxu0 %v2536
    %2869 = vmatpush1.bf16.msra.mxu0 %v2535
    %2870 = vmatprep.subr.bf16.mxu0 %v2596
    %2871 = vmatpush2.bf16.msra.mxu0 %v2595
    %2872 = vmatprep.subr.bf16.mxu0 %v2592
    %2873 = vmatpush2.bf16.msra.mxu0 %v2591
    %2874 = vmatprep.subr.bf16.mxu0 %v2588
    %2875 = vmatpush2.bf16.msra.mxu0 %v2587
    %2876 = vmatprep.subr.bf16.mxu0 %v2584
    %2877 = vmatpush2.bf16.msra.mxu0 %v2583
    %2878 = vmatprep.subr.bf16.mxu0 %v2580
    %2879 = vmatpush2.bf16.msra.mxu0 %v2579
    %2880 = vmatprep.subr.bf16.mxu0 %v2576
    %2881 = vmatpush2.bf16.msra.mxu0 %v2575
    %2882 = vmatprep.subr.bf16.mxu0 %v2572
    %2883 = vmatpush2.bf16.msra.mxu0 %v2571
    %2884 = vmatprep.subr.bf16.mxu0 %v2568
    %2885 = vmatpush2.bf16.msra.mxu0 %v2567
    %2886 = vmatprep.mubr.bf16.mxu0 %v1934
    %2887 = vmatmul.mubr.bf16.gmra.mxu0 %v1933
    %v2888 = vpop.f32.mrf.mxu0
    %v2889 = vadd.f32 %v2846, %v2888
    %v2890 = vpop.f32.mrf.mxu0
    %v2891 = vadd.f32 %v2848, %v2890
    %v2892 = vpop.f32.mrf.mxu0
    %v2893 = vadd.f32 %v2850, %v2892
    %v2894 = vpop.f32.mrf.mxu0
    %v2895 = vadd.f32 %v2852, %v2894
    %2896 = vdwg.mxu0
    %v2897 = vmax.f32 %v2803, 0.0
    %v2898 = vmax.f32 %v2805, 0.0
    %v2899 = vmax.f32 %v2889, 0.0
    %v2900 = vmax.f32 %v2891, 0.0
    %v2901 = vmax.f32 %v2807, 0.0
    %v2902 = vmax.f32 %v2809, 0.0
    %v2903 = vmax.f32 %v2893, 0.0
    %v2904 = vmax.f32 %v2895, 0.0
    %v2905 = vpack.c.bf16 %v2901, %v2897
    %v2906 = vpack.c.bf16 %v2902, %v2898
    %v2907 = vpack.c.bf16 %v2903, %v2899
    %v2908 = vpack.c.bf16 %v2904, %v2900
    %v2909 = vld [vmem:[#allocation11] sm:$0xf]
    %v2910 = vld [vmem:[#allocation11 + $0x4] sm:$0xf]
    %v2911 = vld [vmem:[#allocation11 + $0x8] sm:$0xf]
    %v2912 = vld [vmem:[#allocation11 + $0xc] sm:$0xf]
    %v2913 = vld [vmem:[#allocation11 + $0x10] sm:$0xf]
    %v2914 = vld [vmem:[#allocation11 + $0x14] sm:$0xf]
    %v2915 = vld [vmem:[#allocation11 + $0x18] sm:$0xf]
    %v2916 = vld [vmem:[#allocation11 + $0x1c] sm:$0xf]
    %v2917 = vld [vmem:[#allocation11 + $0x20] sm:$0xf]
    %v2918 = vld [vmem:[#allocation11 + $0x24] sm:$0xf]
    %v2919 = vld [vmem:[#allocation11 + $0x28] sm:$0xf]
    %v2920 = vld [vmem:[#allocation11 + $0x2c] sm:$0xf]
    %v2921 = vld [vmem:[#allocation11 + $0x30] sm:$0xf]
    %v2922 = vld [vmem:[#allocation11 + $0x34] sm:$0xf]
    %v2923 = vld [vmem:[#allocation11 + $0x38] sm:$0xf]
    %v2924 = vld [vmem:[#allocation11 + $0x3c] sm:$0xf]
    %v2925 = vld [vmem:[#allocation11 + $0x40] sm:$0xf]
    %v2926 = vld [vmem:[#allocation11 + $0x44] sm:$0xf]
    %v2927 = vld [vmem:[#allocation11 + $0x48] sm:$0xf]
    %v2928 = vld [vmem:[#allocation11 + $0x4c] sm:$0xf]
    %v2929 = vld [vmem:[#allocation11 + $0x50] sm:$0xf]
    %v2930 = vld [vmem:[#allocation11 + $0x54] sm:$0xf]
    %v2931 = vld [vmem:[#allocation11 + $0x58] sm:$0xf]
    %v2932 = vld [vmem:[#allocation11 + $0x5c] sm:$0xf]
    %v2933 = vld [vmem:[#allocation11 + $0x60] sm:$0xf]
    %v2934 = vld [vmem:[#allocation11 + $0x64] sm:$0xf]
    %v2935 = vld [vmem:[#allocation11 + $0x68] sm:$0xf]
    %v2936 = vld [vmem:[#allocation11 + $0x6c] sm:$0xf]
    %v2937 = vld [vmem:[#allocation11 + $0x70] sm:$0xf]
    %v2938 = vld [vmem:[#allocation11 + $0x74] sm:$0xf]
    %v2939 = vld [vmem:[#allocation11 + $0x78] sm:$0xf]
    %v2940 = vld [vmem:[#allocation11 + $0x7c] sm:$0xf]
    %v2941 = vld [vmem:[#allocation11 + $0x80] sm:$0xf]
    %v2942 = vld [vmem:[#allocation11 + $0x84] sm:$0xf]
    %v2943 = vld [vmem:[#allocation11 + $0x88] sm:$0xf]
    %v2944 = vld [vmem:[#allocation11 + $0x8c] sm:$0xf]
    %v2945 = vld [vmem:[#allocation11 + $0x90] sm:$0xf]
    %v2946 = vld [vmem:[#allocation11 + $0x94] sm:$0xf]
    %v2947 = vld [vmem:[#allocation11 + $0x98] sm:$0xf]
    %v2948 = vld [vmem:[#allocation11 + $0x9c] sm:$0xf]
    %v2949 = vld [vmem:[#allocation11 + $0xa0] sm:$0xf]
    %v2950 = vld [vmem:[#allocation11 + $0xa4] sm:$0xf]
    %v2951 = vld [vmem:[#allocation11 + $0xa8] sm:$0xf]
    %v2952 = vld [vmem:[#allocation11 + $0xac] sm:$0xf]
    %v2953 = vld [vmem:[#allocation11 + $0xb0] sm:$0xf]
    %v2954 = vld [vmem:[#allocation11 + $0xb4] sm:$0xf]
    %v2955 = vld [vmem:[#allocation11 + $0xb8] sm:$0xf]
    %v2956 = vld [vmem:[#allocation11 + $0xbc] sm:$0xf]
    %v2957 = vld [vmem:[#allocation11 + $0xc0] sm:$0xf]
    %v2958 = vld [vmem:[#allocation11 + $0xc4] sm:$0xf]
    %v2959 = vld [vmem:[#allocation11 + $0xc8] sm:$0xf]
    %v2960 = vld [vmem:[#allocation11 + $0xcc] sm:$0xf]
    %v2961 = vld [vmem:[#allocation11 + $0xd0] sm:$0xf]
    %v2962 = vld [vmem:[#allocation11 + $0xd4] sm:$0xf]
    %v2963 = vld [vmem:[#allocation11 + $0xd8] sm:$0xf]
    %v2964 = vld [vmem:[#allocation11 + $0xdc] sm:$0xf]
    %v2965 = vld [vmem:[#allocation11 + $0xe0] sm:$0xf]
    %v2966 = vld [vmem:[#allocation11 + $0xe4] sm:$0xf]
    %v2967 = vld [vmem:[#allocation11 + $0xe8] sm:$0xf]
    %v2968 = vld [vmem:[#allocation11 + $0xec] sm:$0xf]
    %v2969 = vld [vmem:[#allocation11 + $0xf0] sm:$0xf]
    %v2970 = vld [vmem:[#allocation11 + $0xf4] sm:$0xf]
    %v2971 = vld [vmem:[#allocation11 + $0xf8] sm:$0xf]
    %v2972 = vld [vmem:[#allocation11 + $0xfc] sm:$0xf]
    %v2973 = vld [vmem:[%s6] sm:$0x1]
    %v2975 = vlaneseq
    %v2976 = vshrl.u32 %v2975, 7
    %v2977 = vsub.s32 0, %v2976
    %v2978 = vrot.slane %v2973, %v2977
    %v3044 = vunpack.c.l.b16 %v2909
    %v3045 = vunpack.c.l.b16 %v2910
    %v3046 = vunpack.c.l.b16 %v2911
    %v3047 = vunpack.c.l.b16 %v2912
    %v3048 = vunpack.c.l.b16 %v2913
    %v3049 = vunpack.c.l.b16 %v2914
    %v3050 = vunpack.c.l.b16 %v2915
    %v3051 = vunpack.c.l.b16 %v2916
    %v3052 = vunpack.c.l.b16 %v2917
    %v3053 = vunpack.c.l.b16 %v2918
    %v3054 = vunpack.c.l.b16 %v2919
    %v3055 = vunpack.c.l.b16 %v2920
    %v3056 = vunpack.c.l.b16 %v2921
    %v3057 = vunpack.c.l.b16 %v2922
    %v3058 = vunpack.c.l.b16 %v2923
    %v3059 = vunpack.c.l.b16 %v2924
    %v3060 = vunpack.c.l.b16 %v2925
    %v3061 = vunpack.c.l.b16 %v2926
    %v3062 = vunpack.c.l.b16 %v2927
    %v3063 = vunpack.c.l.b16 %v2928
    %v3064 = vunpack.c.l.b16 %v2929
    %v3065 = vunpack.c.l.b16 %v2930
    %v3066 = vunpack.c.l.b16 %v2931
    %v3067 = vunpack.c.l.b16 %v2932
    %v3068 = vunpack.c.l.b16 %v2933
    %v3069 = vunpack.c.l.b16 %v2934
    %v3070 = vunpack.c.l.b16 %v2935
    %v3071 = vunpack.c.l.b16 %v2936
    %v3072 = vunpack.c.l.b16 %v2937
    %v3073 = vunpack.c.l.b16 %v2938
    %v3074 = vunpack.c.l.b16 %v2939
    %v3075 = vunpack.c.l.b16 %v2940
    %v3076 = vunpack.c.l.b16 %v2941
    %v3077 = vunpack.c.l.b16 %v2942
    %v3078 = vunpack.c.l.b16 %v2943
    %v3079 = vunpack.c.l.b16 %v2944
    %v3080 = vunpack.c.l.b16 %v2945
    %v3081 = vunpack.c.l.b16 %v2946
    %v3082 = vunpack.c.l.b16 %v2947
    %v3083 = vunpack.c.l.b16 %v2948
    %v3084 = vunpack.c.l.b16 %v2949
    %v3085 = vunpack.c.l.b16 %v2950
    %v3086 = vunpack.c.l.b16 %v2951
    %v3087 = vunpack.c.l.b16 %v2952
    %v3088 = vunpack.c.l.b16 %v2953
    %v3089 = vunpack.c.l.b16 %v2954
    %v3090 = vunpack.c.l.b16 %v2955
    %v3091 = vunpack.c.l.b16 %v2956
    %v3092 = vunpack.c.l.b16 %v2957
    %v3093 = vunpack.c.l.b16 %v2958
    %v3094 = vunpack.c.l.b16 %v2959
    %v3095 = vunpack.c.l.b16 %v2960
    %v3096 = vunpack.c.l.b16 %v2961
    %v3097 = vunpack.c.l.b16 %v2962
    %v3098 = vunpack.c.l.b16 %v2963
    %v3099 = vunpack.c.l.b16 %v2964
    %v3100 = vunpack.c.l.b16 %v2965
    %v3101 = vunpack.c.l.b16 %v2966
    %v3102 = vunpack.c.l.b16 %v2967
    %v3103 = vunpack.c.l.b16 %v2968
    %v3104 = vunpack.c.l.b16 %v2969
    %v3105 = vunpack.c.l.b16 %v2970
    %v3106 = vunpack.c.l.b16 %v2971
    %v3107 = vunpack.c.l.b16 %v2972
    %v3108 = vpack.c.b16 %v3045, %v3044
    %v3109 = vpack.c.b16 %v3047, %v3046
    %v3110 = vpack.c.b16 %v3049, %v3048
    %v3111 = vpack.c.b16 %v3051, %v3050
    %v3112 = vpack.c.b16 %v3053, %v3052
    %v3113 = vpack.c.b16 %v3055, %v3054
    %v3114 = vpack.c.b16 %v3057, %v3056
    %v3115 = vpack.c.b16 %v3059, %v3058
    %v3116 = vpack.c.b16 %v3061, %v3060
    %v3117 = vpack.c.b16 %v3063, %v3062
    %v3118 = vpack.c.b16 %v3065, %v3064
    %v3119 = vpack.c.b16 %v3067, %v3066
    %v3120 = vpack.c.b16 %v3069, %v3068
    %v3121 = vpack.c.b16 %v3071, %v3070
    %v3122 = vpack.c.b16 %v3073, %v3072
    %v3123 = vpack.c.b16 %v3075, %v3074
    %v3124 = vpack.c.b16 %v3077, %v3076
    %v3125 = vpack.c.b16 %v3079, %v3078
    %v3126 = vpack.c.b16 %v3081, %v3080
    %v3127 = vpack.c.b16 %v3083, %v3082
    %v3128 = vpack.c.b16 %v3085, %v3084
    %v3129 = vpack.c.b16 %v3087, %v3086
    %v3130 = vpack.c.b16 %v3089, %v3088
    %v3131 = vpack.c.b16 %v3091, %v3090
    %v3132 = vpack.c.b16 %v3093, %v3092
    %v3133 = vpack.c.b16 %v3095, %v3094
    %v3134 = vpack.c.b16 %v3097, %v3096
    %v3135 = vpack.c.b16 %v3099, %v3098
    %v3136 = vpack.c.b16 %v3101, %v3100
    %v3137 = vpack.c.b16 %v3103, %v3102
    %v3138 = vpack.c.b16 %v3105, %v3104
    %v3139 = vpack.c.b16 %v3107, %v3106
    %3172 = vmatprep.subr.bf16.mxu0 0
    %3173 = vmatpush1.bf16.msra.mxu0 %v3115
    %3174 = vmatprep.subr.bf16.mxu0 0
    %3175 = vmatpush1.bf16.msra.mxu0 %v3114
    %3176 = vmatprep.subr.bf16.mxu0 0
    %3177 = vmatpush1.bf16.msra.mxu0 %v3113
    %3178 = vmatprep.subr.bf16.mxu0 0
    %3179 = vmatpush1.bf16.msra.mxu0 %v3112
    %3180 = vmatprep.subr.bf16.mxu0 0
    %3181 = vmatpush1.bf16.msra.mxu0 %v3111
    %3182 = vmatprep.subr.bf16.mxu0 0
    %3183 = vmatpush1.bf16.msra.mxu0 %v3110
    %3184 = vmatprep.subr.bf16.mxu0 0
    %3185 = vmatpush1.bf16.msra.mxu0 %v3109
    %3186 = vmatprep.subr.bf16.mxu0 0
    %3187 = vmatpush1.bf16.msra.mxu0 %v3108
    %3188 = vmatprep.subr.bf16.mxu0 0
    %3189 = vmatpush2.bf16.msra.mxu0 %v3123
    %3190 = vmatprep.subr.bf16.mxu0 0
    %3191 = vmatpush2.bf16.msra.mxu0 %v3122
    %3192 = vmatprep.subr.bf16.mxu0 0
    %3193 = vmatpush2.bf16.msra.mxu0 %v3121
    %3194 = vmatprep.subr.bf16.mxu0 0
    %3195 = vmatpush2.bf16.msra.mxu0 %v3120
    %3196 = vmatprep.subr.bf16.mxu0 0
    %3197 = vmatpush2.bf16.msra.mxu0 %v3119
    %3198 = vmatprep.subr.bf16.mxu0 0
    %3199 = vmatpush2.bf16.msra.mxu0 %v3118
    %3200 = vmatprep.subr.bf16.mxu0 0
    %3201 = vmatpush2.bf16.msra.mxu0 %v3117
    %3202 = vmatprep.subr.bf16.mxu0 0
    %3203 = vmatpush2.bf16.msra.mxu0 %v3116
    %3204 = vmatprep.mubr.bf16.mxu0 %v2906
    %3205 = vmatmul.mubr.bf16.gmra.mxu0 %v2905
    %v3206 = vpop.f32.mrf.mxu0
    %v3207 = vadd.f32 %v2978, %v3206
    %v3208 = vpop.f32.mrf.mxu0
    %v3209 = vpop.f32.mrf.mxu0
    %v3210 = vadd.f32 %v2978, %v3209
    %v3211 = vpop.f32.mrf.mxu0
    %3212 = vdwg.mxu0
    %3213 = vmatprep.subr.bf16.mxu0 0
    %3214 = vmatpush1.bf16.msra.mxu0 %v3131
    %3215 = vmatprep.subr.bf16.mxu0 0
    %3216 = vmatpush1.bf16.msra.mxu0 %v3130
    %3217 = vmatprep.subr.bf16.mxu0 0
    %3218 = vmatpush1.bf16.msra.mxu0 %v3129
    %3219 = vmatprep.subr.bf16.mxu0 0
    %3220 = vmatpush1.bf16.msra.mxu0 %v3128
    %3221 = vmatprep.subr.bf16.mxu0 0
    %3222 = vmatpush1.bf16.msra.mxu0 %v3127
    %3223 = vmatprep.subr.bf16.mxu0 0
    %3224 = vmatpush1.bf16.msra.mxu0 %v3126
    %3225 = vmatprep.subr.bf16.mxu0 0
    %3226 = vmatpush1.bf16.msra.mxu0 %v3125
    %3227 = vmatprep.subr.bf16.mxu0 0
    %3228 = vmatpush1.bf16.msra.mxu0 %v3124
    %3229 = vmatprep.subr.bf16.mxu0 0
    %3230 = vmatpush2.bf16.msra.mxu0 %v3139
    %3231 = vmatprep.subr.bf16.mxu0 0
    %3232 = vmatpush2.bf16.msra.mxu0 %v3138
    %3233 = vmatprep.subr.bf16.mxu0 0
    %3234 = vmatpush2.bf16.msra.mxu0 %v3137
    %3235 = vmatprep.subr.bf16.mxu0 0
    %3236 = vmatpush2.bf16.msra.mxu0 %v3136
    %3237 = vmatprep.subr.bf16.mxu0 0
    %3238 = vmatpush2.bf16.msra.mxu0 %v3135
    %3239 = vmatprep.subr.bf16.mxu0 0
    %3240 = vmatpush2.bf16.msra.mxu0 %v3134
    %3241 = vmatprep.subr.bf16.mxu0 0
    %3242 = vmatpush2.bf16.msra.mxu0 %v3133
    %3243 = vmatprep.subr.bf16.mxu0 0
    %3244 = vmatpush2.bf16.msra.mxu0 %v3132
    %3245 = vmatprep.mubr.bf16.mxu0 %v2908
    %3246 = vmatmul.mubr.bf16.gmra.mxu0 %v2907
    %v3247 = vpop.f32.mrf.mxu0
    %v3248 = vadd.f32 %v3207, %v3247
    %v3249 = vpop.f32.mrf.mxu0
    %v3250 = vpop.f32.mrf.mxu0
    %v3251 = vadd.f32 %v3210, %v3250
    %v3252 = vpop.f32.mrf.mxu0
    %3253 = vdwg.mxu0
    %3254 = vst [vmem:[#allocation12] sm:$0xff] %v3248
    %3255 = vst [vmem:[#allocation12 + $0x8] sm:$0xff] %v3251
    // Predicated region
    $region50: #{tpu_custom_call.1} parent=1 // pred_check
      _
    $region51: #{tpu_custom_call.1} parent=1 // pred_check_branch
      %3257 = sbr.rel (0) target = $region53
    $region52: #{tpu_custom_call.1} parent=1 // pred_region
      %s3259 = ssub.s32 256, 256
      %3260 = vsyncadd [#allocation5], %s3259
      %s3261 = sshll.u32 [#allocation12], 4
      %s3262 = int_to_ptr.vmem [resolvable:$true] %s3261
      %3267 = dma.vmem_to_hbm [thread:$0]  %s3262, 256, %s7, [#allocation5], 128, 128, 8
    $region53: #{tpu_custom_call.1} parent=1 // pred_fallthru
      _
    // Predicated region
    $region54: #{tpu_custom_call.1} parent=1 // pred_check
      _
    $region55: #{tpu_custom_call.1} parent=1 // pred_check_branch
      %3269 = sbr.rel (0) target = $region57
    $region56: #{tpu_custom_call.1} parent=1 // pred_region
      %3270 = dma.done [#allocation5], 256
    $region57: #{tpu_custom_call.1} parent=1 // pred_fallthru
      _
    %3271 = vsyncpa [#allocation4], 1
    %3272 = vsyncpa [#allocation7], 1
    %3273 = vsyncpa [#allocation10], 1
    %3274 = vsyncpa [#allocation5], 1

</llo_original>
